<compile_context>
chip_gen: v7x
topology: tpu7x:2x2x1
jax: 0.10.0
libtpu: 0.0.40
codegen_flags: <defaults>
</compile_context>

<pallas_src>
import functools

import numpy as np
import jax
import jax.numpy as jnp
from jax import lax
from jax.experimental import pallas as pl
from jax.experimental.pallas import tpu as pltpu

_LANES = 128
READOUT_NAME = "head"


# ---------------------------------------------------------------------------
# Single fused kernel:
#   forward : h = relu(x @ W1^T + b1); logits = h @ W2^T + b2
#   loss    : mean cross-entropy (padded classes masked out)
#   backward: dlogits = (softmax - onehot)/B -> all grads
#   SGHMC   : v <- (1-alpha) v + lr (g + (p - p0) * prior_coef) + ns * noise
# Momentum outputs alias the momentum inputs (in-place update); the new
# momentum IS the new ".grad" (torch does p.grad = v.clone()).
# ---------------------------------------------------------------------------
def _sghmc_step_kernel(scal_ref, x_ref, y_ref,
                       w1_ref, b1_ref, w2_ref, b2_ref,
                       p0w1_ref, p0b1_ref, p0w2_ref, p0b2_ref,
                       vw1_ref, vb1_ref, vw2_ref, vb2_ref,
                       nw1_ref, nb1_ref, nw2_ref, nb2_ref,
                       logits_ref, loss_ref,
                       vw1_out, vb1_out, vw2_out, vb2_out,
                       *, inv_batch, one_minus_alpha, num_classes):
    # scalars from SMEM
    lr_body = scal_ref[0]
    lr_head = scal_ref[1]
    pc_w = scal_ref[2]      # prior coefficient for weights
    pc_b = scal_ref[3]      # prior coefficient for biases (0 if uninformative)
    ns_body = scal_ref[4]   # noise scale body
    ns_head = scal_ref[5]   # noise scale head

    x = x_ref[...]                      # (B, D)  f32
    w1 = w1_ref[...]; b1 = b1_ref[...]  # (H, D), (1, H)
    w2 = w2_ref[...]; b2 = b2_ref[...]  # (Cp, H), (1, Cp)

    # ---- forward (bf16 operands on MXU, f32 accumulation) ----
    h_pre = lax.dot_general(x.astype(jnp.bfloat16), w1.astype(jnp.bfloat16),
                            (((1,), (1,)), ((), ())),
                            preferred_element_type=jnp.float32) + b1     # (B,H)
    h = jnp.maximum(h_pre, 0.0)
    logits = lax.dot_general(h.astype(jnp.bfloat16), w2.astype(jnp.bfloat16),
                             (((1,), (1,)), ((), ())),
                             preferred_element_type=jnp.float32) + b2    # (B,Cp)
    logits_ref[...] = logits

    B, Cp = logits.shape
    cls = lax.broadcasted_iota(jnp.int32, (B, Cp), 1)
    if num_classes < Cp:
        logits_sm = jnp.where(cls < num_classes, logits, jnp.float32(-1e30))
    else:
        logits_sm = logits
    yoh = (cls == y_ref[...]).astype(jnp.float32)        # one-hot built in-kernel

    # ---- mean cross-entropy loss ----
    m = jnp.max(logits_sm, axis=-1, keepdims=True)
    ez = jnp.exp(logits_sm - m)
    se = jnp.sum(ez, axis=-1, keepdims=True)
    lse = m + jnp.log(se)
    picked = jnp.sum(logits_sm * yoh, axis=-1, keepdims=True)
    loss_ref[...] = jnp.sum(lse - picked, axis=0, keepdims=True) * inv_batch

    # ---- backward ----
    probs = ez / se
    dout = (probs - yoh) * inv_batch                     # (B,Cp); pad cols = 0
    gw2 = lax.dot_general(dout.astype(jnp.bfloat16), h.astype(jnp.bfloat16),
                          (((0,), (0,)), ((), ())),
                          preferred_element_type=jnp.float32)            # (Cp,H)
    gb2 = jnp.sum(dout, axis=0, keepdims=True)                           # (1,Cp)
    dh = lax.dot_general(dout.astype(jnp.bfloat16), w2.astype(jnp.bfloat16),
                         (((1,), (0,)), ((), ())),
                         preferred_element_type=jnp.float32)             # (B,H)
    dh_pre = jnp.where(h_pre > 0.0, dh, 0.0)
    gw1 = lax.dot_general(dh_pre.astype(jnp.bfloat16), x.astype(jnp.bfloat16),
                          (((0,), (0,)), ((), ())),
                          preferred_element_type=jnp.float32)            # (H,D)
    gb1 = jnp.sum(dh_pre, axis=0, keepdims=True)                         # (1,H)

    # ---- SGHMC momentum update (elementwise, f32 on VPU) ----
    vw1_out[...] = (one_minus_alpha * vw1_ref[...]
                    + lr_body * (gw1 + (w1 - p0w1_ref[...]) * pc_w)
                    + ns_body * nw1_ref[...])
    vb1_out[...] = (one_minus_alpha * vb1_ref[...]
                    + lr_body * (gb1 + (b1 - p0b1_ref[...]) * pc_b)
                    + ns_body * nb1_ref[...])
    vw2_out[...] = (one_minus_alpha * vw2_ref[...]
                    + lr_head * (gw2 + (w2 - p0w2_ref[...]) * pc_w)
                    + ns_head * nw2_ref[...])
    vb2_out[...] = (one_minus_alpha * vb2_ref[...]
                    + lr_head * (gb2 + (b2 - p0b2_ref[...]) * pc_b)
                    + ns_head * nb2_ref[...])


def _pad_rows(a, rows):
    return a if a.shape[0] == rows else jnp.pad(a, ((0, rows - a.shape[0]), (0, 0)))


def _pad_cols(a, cols):
    return a if a.shape[1] == cols else jnp.pad(a, ((0, 0), (0, cols - a.shape[1])))


# ---------------------------------------------------------------------------
# Fully-jitted SGHMC step: pad head dim -> noise -> fused pallas_call -> slice.
# ---------------------------------------------------------------------------
def _make_step(*, d_hidden, n_classes, cp, prior_sig, bias_mode,
               momentum_decay, base_seed):
    alpha = float(momentum_decay)
    one_minus_alpha = float(1.0 - alpha)
    informative_bias = (bias_mode != "uninformative")

    def step(x, y, w1, b1, w2, b2, p0w1, p0b1, p0w2, p0b2,
             vw1, vb1, vw2, vb2, lr_body, lr_head, n_eff, nd, step_idx):
        B = x.shape[0]
        x = x.astype(jnp.float32)
        y2 = y.astype(jnp.int32).reshape(B, 1)

        w1 = w1.astype(jnp.float32); b1 = b1.astype(jnp.float32)
        p0w1 = p0w1.astype(jnp.float32); p0b1 = p0b1.astype(jnp.float32)
        w2p = _pad_rows(w2.astype(jnp.float32), cp)
        b2p = _pad_cols(b2.astype(jnp.float32), cp)
        p0w2p = _pad_rows(p0w2.astype(jnp.float32), cp)
        p0b2p = _pad_cols(p0b2.astype(jnp.float32), cp)

        # per-step scalar coefficients -> one small SMEM vector
        pc_w = (1.0 / (prior_sig ** 2)) / n_eff
        pc_b = pc_w if informative_bias else jnp.float32(0.0)
        ns_body = nd * jnp.sqrt(2.0 * alpha * lr_body)
        ns_head = nd * jnp.sqrt(2.0 * alpha * lr_head)
        scal = jnp.stack([lr_body, lr_head, pc_w, pc_b,
                          ns_body, ns_head]).astype(jnp.float32)

        # Gaussian noise (padded head rows/cols get exactly zero noise so the
        # persistent padded momentum entries stay zero).
        key = jax.random.fold_in(jax.random.PRNGKey(base_seed), step_idx)
        k1, k2, k3, k4 = jax.random.split(key, 4)
        nw1 = jax.random.normal(k1, w1.shape, jnp.float32)
        nb1 = jax.random.normal(k2, b1.shape, jnp.float32)
        nw2 = _pad_rows(jax.random.normal(k3, w2.shape, jnp.float32), cp)
        nb2 = _pad_cols(jax.random.normal(k4, b2.shape, jnp.float32), cp)

        kernel = functools.partial(_sghmc_step_kernel,
                                   inv_batch=1.0 / float(B),
                                   one_minus_alpha=one_minus_alpha,
                                   num_classes=n_classes)
        vmem = pl.BlockSpec(memory_space=pltpu.MemorySpace.VMEM)
        smem = pl.BlockSpec(memory_space=pltpu.MemorySpace.SMEM)
        out_shapes = (
            jax.ShapeDtypeStruct((B, cp), jnp.float32),          # logits (padded)
            jax.ShapeDtypeStruct((1, 1), jnp.float32),           # loss
            jax.ShapeDtypeStruct(w1.shape, jnp.float32),         # new v body.weight
            jax.ShapeDtypeStruct(b1.shape, jnp.float32),         # new v body.bias
            jax.ShapeDtypeStruct((cp, d_hidden), jnp.float32),   # new v head.weight
            jax.ShapeDtypeStruct((1, cp), jnp.float32),          # new v head.bias
        )
        logits_p, loss, vw1n, vb1n, vw2n, vb2n = pl.pallas_call(
            kernel,
            out_shape=out_shapes,
            in_specs=[smem] + [vmem] * 18,
            out_specs=[vmem] * 6,
            input_output_aliases={11: 2, 12: 3, 13: 4, 14: 5},   # momentum in-place
        )(scal, x, y2, w1, b1, w2p, b2p, p0w1, p0b1, p0w2p, p0b2p,
          vw1, vb1, vw2, vb2, nw1, nb1, nw2, nb2)

        return loss[0, 0], logits_p[:, :n_classes], vw1n, vb1n, vw2n, vb2n

    # TODO(synk): donate_argnums=(10,11,12,13) on real TPU (CPU interpret warns).
    return jax.jit(step)


# ---------------------------------------------------------------------------
# Tiny 2-layer MLP "net" (body linear -> relu -> readout "head" linear).
# Weights are (out, in) like torch.nn.Linear; biases stored as (1, out).
# ---------------------------------------------------------------------------
def init_mlp_params(key, d_in, d_hidden, d_out):
    k1, k2, k3, k4 = jax.random.split(key, 4)
    return {
        "body.weight": 0.1 * jax.random.normal(k1, (d_hidden, d_in), jnp.float32),
        "body.bias":   0.1 * jax.random.normal(k2, (1, d_hidden), jnp.float32),
        "head.weight": 0.1 * jax.random.normal(k3, (d_out, d_hidden), jnp.float32),
        "head.bias":   0.1 * jax.random.normal(k4, (1, d_out), jnp.float32),
    }


# ---------------------------------------------------------------------------
# SGHMC sampler model (JAX/Pallas equivalent of the PyTorch Model).
# ---------------------------------------------------------------------------
class SGHMCModel:
    def __init__(self, ND, prior_sig=1.0, bias="informative",
                 momentum_decay=0.05, seed=0):
        self.ND = ND
        self.prior_sig = float(prior_sig)
        self.bias = bias
        self.momentum_decay = float(momentum_decay)
        self.momentum_buffer = {}
        self._seed = int(seed)
        self._step_count = 0
        self._built = False

    def _maybe_build(self, net_params):
        if self._built:
            return
        H, D = net_params["body.weight"].shape
        C = net_params["head.weight"].shape[0]
        Cp = max(_LANES, ((C + _LANES - 1) // _LANES) * _LANES)  # lane-dense head
        self._C, self._Cp, self._H, self._D = C, Cp, H, D
        self._v = {
            "body.weight": jnp.zeros((H, D), jnp.float32),
            "body.bias":   jnp.zeros((1, H), jnp.float32),
            "head.weight": jnp.zeros((Cp, H), jnp.float32),
            "head.bias":   jnp.zeros((1, Cp), jnp.float32),
        }
        self._step_fn = _make_step(d_hidden=H, n_classes=C, cp=Cp,
                                   prior_sig=self.prior_sig, bias_mode=self.bias,
                                   momentum_decay=self.momentum_decay,
                                   base_seed=self._seed)
        self._built = True

    def forward(self, x, y, net_params, net0_params, lrs, Ninflate=1.0, nd=1.0):
        """Returns (loss device scalar, logits, new_grads dict); new_grads is
        the SGHMC update (== momentum), i.e. what torch puts in p.grad."""
        self._maybe_build(net_params)
        if len(lrs) == 1:
            lr_body, lr_head = float(lrs[0]), float(lrs[0])
        else:
            lr_body, lr_head = float(lrs[0]), float(lrs[1])
        n_eff = float(self.ND) * float(Ninflate)
        step_idx = self._step_count
        self._step_count += 1

        loss, out, vw1n, vb1n, vw2n, vb2n = self._step_fn(
            x, y,
            net_params["body.weight"], net_params["body.bias"],
            net_params["head.weight"], net_params["head.bias"],
            net0_params["body.weight"], net0_params["body.bias"],
            net0_params["head.weight"], net0_params["head.bias"],
            self._v["body.weight"], self._v["body.bias"],
            self._v["head.weight"], self._v["head.bias"],
            lr_body, lr_head, n_eff, float(nd), step_idx)

        # persistent (padded) momentum state
        self._v = {"body.weight": vw1n, "body.bias": vb1n,
                   "head.weight": vw2n, "head.bias": vb2n}
        C = self._C
        new_grads = {"body.weight": vw1n, "body.bias": vb1n,
                     "head.weight": vw2n[:C, :], "head.bias": vb2n[:, :C]}
        self.momentum_buffer = dict(new_grads)
        return loss, out, new_grads

    def reset_momentum_buffer(self, net_params=None):
        if self._built:
            self._v = {k: jnp.zeros_like(v) for k, v in self._v.items()}
        if net_params is not None:
            self.momentum_buffer = {k: jnp.zeros_like(v)
                                    for k, v in net_params.items()}


# ---------------------------------------------------------------------------
if __name__ == "__main__":
    key = jax.random.PRNGKey(0)
    B, D, H, C = 8, 128, 128, 16          # lane-dense D/H; small classifier head

    k_x, k_y, k_net, k_net0 = jax.random.split(key, 4)
    x = jax.random.normal(k_x, (B, D), jnp.float32)
    y = jax.random.randint(k_y, (B,), 0, C)

    net_params = init_mlp_params(k_net, D, H, C)      # workhorse net
    net0_params = init_mlp_params(k_net0, D, H, C)    # prior mean net

    model = SGHMCModel(ND=1000, prior_sig=1.0, bias="informative",
                       momentum_decay=0.05, seed=0)

    loss, out, new_grads = model.forward(
        x, y, net_params, net0_params, lrs=[1e-2, 1e-3], Ninflate=1.0, nd=1.0)
    # Second step exercises the persistent momentum / in-place alias path.
    loss2, out2, new_grads2 = model.forward(
        x, y, net_params, net0_params, lrs=[1e-2, 1e-3], Ninflate=1.0, nd=1.0)

    jax.block_until_ready((loss, out, new_grads, loss2, out2, new_grads2))

    assert out.shape == (B, C) and out2.shape == (B, C)
    assert np.isfinite(float(loss)) and np.isfinite(float(loss2))
    for name, p in net_params.items():
        assert new_grads2[name].shape == p.shape
    print("KERNEL_OK")
</pallas_src>

<mosaic_0001>
module attributes {stable_mosaic.version = 11 : i64} {
  func.func @_sghmc_step_kernel(%arg0: memref<6xf32, #tpu.memory_space<smem>>, %arg1: memref<8x128xf32, #tpu.memory_space<vmem>>, %arg2: memref<8x1xi32, #tpu.memory_space<vmem>>, %arg3: memref<128x128xf32, #tpu.memory_space<vmem>>, %arg4: memref<1x128xf32, #tpu.memory_space<vmem>>, %arg5: memref<128x128xf32, #tpu.memory_space<vmem>>, %arg6: memref<1x128xf32, #tpu.memory_space<vmem>>, %arg7: memref<128x128xf32, #tpu.memory_space<vmem>>, %arg8: memref<1x128xf32, #tpu.memory_space<vmem>>, %arg9: memref<128x128xf32, #tpu.memory_space<vmem>>, %arg10: memref<1x128xf32, #tpu.memory_space<vmem>>, %arg11: memref<128x128xf32, #tpu.memory_space<vmem>>, %arg12: memref<1x128xf32, #tpu.memory_space<vmem>>, %arg13: memref<128x128xf32, #tpu.memory_space<vmem>>, %arg14: memref<1x128xf32, #tpu.memory_space<vmem>>, %arg15: memref<128x128xf32, #tpu.memory_space<vmem>>, %arg16: memref<1x128xf32, #tpu.memory_space<vmem>>, %arg17: memref<128x128xf32, #tpu.memory_space<vmem>>, %arg18: memref<1x128xf32, #tpu.memory_space<vmem>>, %arg19: memref<8x128xf32, #tpu.memory_space<vmem>>, %arg20: memref<1x1xf32, #tpu.memory_space<vmem>>, %arg21: memref<128x128xf32, #tpu.memory_space<vmem>>, %arg22: memref<1x128xf32, #tpu.memory_space<vmem>>, %arg23: memref<128x128xf32, #tpu.memory_space<vmem>>, %arg24: memref<1x128xf32, #tpu.memory_space<vmem>>) attributes {dimension_semantics = [], scalar_prefetch = 0 : i64, scratch_operands = 0 : i64, tpu.core_type = #tpu.core_type<tc>} {
    %c0 = arith.constant 0 : index
    %0 = memref.load %arg0[%c0] : memref<6xf32, #tpu.memory_space<smem>>
    %c1 = arith.constant 1 : index
    %1 = memref.load %arg0[%c1] : memref<6xf32, #tpu.memory_space<smem>>
    %c2 = arith.constant 2 : index
    %2 = memref.load %arg0[%c2] : memref<6xf32, #tpu.memory_space<smem>>
    %c3 = arith.constant 3 : index
    %3 = memref.load %arg0[%c3] : memref<6xf32, #tpu.memory_space<smem>>
    %c4 = arith.constant 4 : index
    %4 = memref.load %arg0[%c4] : memref<6xf32, #tpu.memory_space<smem>>
    %c5 = arith.constant 5 : index
    %5 = memref.load %arg0[%c5] : memref<6xf32, #tpu.memory_space<smem>>
    %c0_0 = arith.constant 0 : index
    %c0_1 = arith.constant 0 : index
    %6 = vector.load %arg1[%c0_0, %c0_1] : memref<8x128xf32, #tpu.memory_space<vmem>>, vector<8x128xf32>
    %c0_2 = arith.constant 0 : index
    %c0_3 = arith.constant 0 : index
    %7 = vector.load %arg3[%c0_2, %c0_3] : memref<128x128xf32, #tpu.memory_space<vmem>>, vector<128x128xf32>
    %c0_4 = arith.constant 0 : index
    %c0_5 = arith.constant 0 : index
    %8 = vector.load %arg4[%c0_4, %c0_5] : memref<1x128xf32, #tpu.memory_space<vmem>>, vector<1x128xf32>
    %c0_6 = arith.constant 0 : index
    %c0_7 = arith.constant 0 : index
    %9 = vector.load %arg5[%c0_6, %c0_7] : memref<128x128xf32, #tpu.memory_space<vmem>>, vector<128x128xf32>
    %c0_8 = arith.constant 0 : index
    %c0_9 = arith.constant 0 : index
    %10 = vector.load %arg6[%c0_8, %c0_9] : memref<1x128xf32, #tpu.memory_space<vmem>>, vector<1x128xf32>
    %11 = arith.truncf %6 : vector<8x128xf32> to vector<8x128xbf16>
    %12 = arith.truncf %7 : vector<128x128xf32> to vector<128x128xbf16>
    %cst = arith.constant dense<0.000000e+00> : vector<8x128xf32>
    %13 = tpu.matmul %11, %12, %cst {dimension_numbers = #tpu.dot_dimension_numbers<[1], [1], [0], [0], [0, 0, 1, 0], [], []>} : vector<8x128xbf16>, vector<128x128xbf16>, vector<8x128xf32> -> vector<8x128xf32>
    %14 = vector.broadcast %8 : vector<1x128xf32> to vector<8x128xf32>
    %15 = arith.addf %13, %14 : vector<8x128xf32>
    %cst_10 = arith.constant 0.000000e+00 : f32
    %16 = vector.broadcast %cst_10 : f32 to vector<8x128xf32>
    %17 = arith.maximumf %15, %16 : vector<8x128xf32>
    %18 = arith.truncf %17 : vector<8x128xf32> to vector<8x128xbf16>
    %19 = arith.truncf %9 : vector<128x128xf32> to vector<128x128xbf16>
    %cst_11 = arith.constant dense<0.000000e+00> : vector<8x128xf32>
    %20 = tpu.matmul %18, %19, %cst_11 {dimension_numbers = #tpu.dot_dimension_numbers<[1], [1], [0], [0], [0, 0, 1, 0], [], []>} : vector<8x128xbf16>, vector<128x128xbf16>, vector<8x128xf32> -> vector<8x128xf32>
    %21 = vector.broadcast %10 : vector<1x128xf32> to vector<8x128xf32>
    %22 = arith.addf %20, %21 : vector<8x128xf32>
    %c0_12 = arith.constant 0 : index
    %c0_13 = arith.constant 0 : index
    %23 = vector.load %arg19[%c0_12, %c0_13] : memref<8x128xf32, #tpu.memory_space<vmem>>, vector<8x128xf32>
    tpu.vector_store %arg19[%c0_12, %c0_13], %22 {strides = array<i32>} : memref<8x128xf32, #tpu.memory_space<vmem>>, vector<8x128xf32>,
    %24 = tpu.iota {dimensions = array<i32: 1>} : vector<8x128xi32>
    %c16_i32 = arith.constant 16 : i32
    %25 = vector.broadcast %c16_i32 : i32 to vector<8x128xi32>
    %26 = arith.cmpi slt, %24, %25 : vector<8x128xi32>
    %cst_14 = arith.constant -1.000000e+30 : f32
    %27 = vector.broadcast %cst_14 : f32 to vector<8x128xf32>
    %28 = arith.select %26, %22, %27 : vector<8x128xi1>, vector<8x128xf32>
    %c0_15 = arith.constant 0 : index
    %c0_16 = arith.constant 0 : index
    %29 = vector.load %arg2[%c0_15, %c0_16] : memref<8x1xi32, #tpu.memory_space<vmem>>, vector<8x1xi32>
    %30 = vector.broadcast %29 : vector<8x1xi32> to vector<8x128xi32>
    %31 = arith.cmpi eq, %24, %30 : vector<8x128xi32>
    %32 = arith.extui %31 : vector<8x128xi1> to vector<8x128xi32>
    %33 = arith.sitofp %32 : vector<8x128xi32> to vector<8x128xf32>
    %cst_17 = arith.constant dense<0xFF800000> : vector<8xf32>
    %34 = vector.multi_reduction <maximumf>, %28, %cst_17 [1] : vector<8x128xf32> to vector<8xf32>
    %35 = vector.shape_cast %34 : vector<8xf32> to vector<8x1xf32>
    %36 = vector.broadcast %35 : vector<8x1xf32> to vector<8x128xf32>
    %37 = arith.subf %28, %36 : vector<8x128xf32>
    %38 = math.exp %37 : vector<8x128xf32>
    %cst_18 = arith.constant dense<0.000000e+00> : vector<8xf32>
    %39 = vector.multi_reduction <add>, %38, %cst_18 [1] : vector<8x128xf32> to vector<8xf32>
    %40 = vector.shape_cast %39 : vector<8xf32> to vector<8x1xf32>
    %41 = math.log %40 : vector<8x1xf32>
    %42 = arith.addf %35, %41 : vector<8x1xf32>
    %43 = arith.mulf %28, %33 : vector<8x128xf32>
    %cst_19 = arith.constant dense<0.000000e+00> : vector<8xf32>
    %44 = vector.multi_reduction <add>, %43, %cst_19 [1] : vector<8x128xf32> to vector<8xf32>
    %45 = vector.shape_cast %44 : vector<8xf32> to vector<8x1xf32>
    %46 = arith.subf %42, %45 : vector<8x1xf32>
    %cst_20 = arith.constant dense<0.000000e+00> : vector<1xf32>
    %47 = vector.multi_reduction <add>, %46, %cst_20 [0] : vector<8x1xf32> to vector<1xf32>
    %48 = vector.shape_cast %47 : vector<1xf32> to vector<1x1xf32>
    %cst_21 = arith.constant 1.250000e-01 : f32
    %49 = vector.broadcast %cst_21 : f32 to vector<1x1xf32>
    %50 = arith.mulf %48, %49 : vector<1x1xf32>
    %c0_22 = arith.constant 0 : index
    %c0_23 = arith.constant 0 : index
    %51 = vector.load %arg20[%c0_22, %c0_23] : memref<1x1xf32, #tpu.memory_space<vmem>>, vector<1x1xf32>
    tpu.vector_store %arg20[%c0_22, %c0_23], %50 {strides = array<i32>} : memref<1x1xf32, #tpu.memory_space<vmem>>, vector<1x1xf32>,
    %52 = vector.broadcast %40 : vector<8x1xf32> to vector<8x128xf32>
    %53 = arith.divf %38, %52 : vector<8x128xf32>
    %54 = arith.subf %53, %33 : vector<8x128xf32>
    %cst_24 = arith.constant 1.250000e-01 : f32
    %55 = vector.broadcast %cst_24 : f32 to vector<8x128xf32>
    %56 = arith.mulf %54, %55 : vector<8x128xf32>
    %57 = arith.truncf %56 : vector<8x128xf32> to vector<8x128xbf16>
    %58 = arith.truncf %17 : vector<8x128xf32> to vector<8x128xbf16>
    %cst_25 = arith.constant dense<0.000000e+00> : vector<128x128xf32>
    %59 = tpu.matmul %57, %58, %cst_25 {dimension_numbers = #tpu.dot_dimension_numbers<[0], [0], [1], [1], [0, 1, 1, 1], [], []>} : vector<8x128xbf16>, vector<8x128xbf16>, vector<128x128xf32> -> vector<128x128xf32>
    %cst_26 = arith.constant dense<0.000000e+00> : vector<128xf32>
    %60 = vector.multi_reduction <add>, %56, %cst_26 [0] : vector<8x128xf32> to vector<128xf32>
    %61 = vector.shape_cast %60 : vector<128xf32> to vector<1x128xf32>
    %62 = arith.truncf %56 : vector<8x128xf32> to vector<8x128xbf16>
    %63 = arith.truncf %9 : vector<128x128xf32> to vector<128x128xbf16>
    %cst_27 = arith.constant dense<0.000000e+00> : vector<8x128xf32>
    %64 = tpu.matmul %62, %63, %cst_27 {dimension_numbers = #tpu.dot_dimension_numbers<[1], [0], [0], [1], [0, 0, 1, 1], [], []>} : vector<8x128xbf16>, vector<128x128xbf16>, vector<8x128xf32> -> vector<8x128xf32>
    %cst_28 = arith.constant 0.000000e+00 : f32
    %65 = vector.broadcast %cst_28 : f32 to vector<8x128xf32>
    %66 = arith.cmpf ogt, %15, %65 : vector<8x128xf32>
    %cst_29 = arith.constant 0.000000e+00 : f32
    %67 = vector.broadcast %cst_29 : f32 to vector<8x128xf32>
    %68 = arith.select %66, %64, %67 : vector<8x128xi1>, vector<8x128xf32>
    %69 = arith.truncf %68 : vector<8x128xf32> to vector<8x128xbf16>
    %70 = arith.truncf %6 : vector<8x128xf32> to vector<8x128xbf16>
    %cst_30 = arith.constant dense<0.000000e+00> : vector<128x128xf32>
    %71 = tpu.matmul %69, %70, %cst_30 {dimension_numbers = #tpu.dot_dimension_numbers<[0], [0], [1], [1], [0, 1, 1, 1], [], []>} : vector<8x128xbf16>, vector<8x128xbf16>, vector<128x128xf32> -> vector<128x128xf32>
    %cst_31 = arith.constant dense<0.000000e+00> : vector<128xf32>
    %72 = vector.multi_reduction <add>, %68, %cst_31 [0] : vector<8x128xf32> to vector<128xf32>
    %73 = vector.shape_cast %72 : vector<128xf32> to vector<1x128xf32>
    %c0_32 = arith.constant 0 : index
    %c0_33 = arith.constant 0 : index
    %74 = vector.load %arg11[%c0_32, %c0_33] : memref<128x128xf32, #tpu.memory_space<vmem>>, vector<128x128xf32>
    %cst_34 = arith.constant 0.949999988 : f32
    %75 = vector.broadcast %cst_34 : f32 to vector<128x128xf32>
    %76 = arith.mulf %75, %74 : vector<128x128xf32>
    %c0_35 = arith.constant 0 : index
    %c0_36 = arith.constant 0 : index
    %77 = vector.load %arg7[%c0_35, %c0_36] : memref<128x128xf32, #tpu.memory_space<vmem>>, vector<128x128xf32>
    %78 = arith.subf %7, %77 : vector<128x128xf32>
    %79 = vector.broadcast %2 : f32 to vector<128x128xf32>
    %80 = arith.mulf %78, %79 : vector<128x128xf32>
    %81 = arith.addf %71, %80 : vector<128x128xf32>
    %82 = vector.broadcast %0 : f32 to vector<128x128xf32>
    %83 = arith.mulf %82, %81 : vector<128x128xf32>
    %84 = arith.addf %76, %83 : vector<128x128xf32>
    %c0_37 = arith.constant 0 : index
    %c0_38 = arith.constant 0 : index
    %85 = vector.load %arg15[%c0_37, %c0_38] : memref<128x128xf32, #tpu.memory_space<vmem>>, vector<128x128xf32>
    %86 = vector.broadcast %4 : f32 to vector<128x128xf32>
    %87 = arith.mulf %86, %85 : vector<128x128xf32>
    %88 = arith.addf %84, %87 : vector<128x128xf32>
    %c0_39 = arith.constant 0 : index
    %c0_40 = arith.constant 0 : index
    %89 = vector.load %arg21[%c0_39, %c0_40] : memref<128x128xf32, #tpu.memory_space<vmem>>, vector<128x128xf32>
    tpu.vector_store %arg21[%c0_39, %c0_40], %88 {strides = array<i32>} : memref<128x128xf32, #tpu.memory_space<vmem>>, vector<128x128xf32>,
    %c0_41 = arith.constant 0 : index
    %c0_42 = arith.constant 0 : index
    %90 = vector.load %arg12[%c0_41, %c0_42] : memref<1x128xf32, #tpu.memory_space<vmem>>, vector<1x128xf32>
    %cst_43 = arith.constant 0.949999988 : f32
    %91 = vector.broadcast %cst_43 : f32 to vector<1x128xf32>
    %92 = arith.mulf %91, %90 : vector<1x128xf32>
    %c0_44 = arith.constant 0 : index
    %c0_45 = arith.constant 0 : index
    %93 = vector.load %arg8[%c0_44, %c0_45] : memref<1x128xf32, #tpu.memory_space<vmem>>, vector<1x128xf32>
    %94 = arith.subf %8, %93 : vector<1x128xf32>
    %95 = vector.broadcast %3 : f32 to vector<1x128xf32>
    %96 = arith.mulf %94, %95 : vector<1x128xf32>
    %97 = arith.addf %73, %96 : vector<1x128xf32>
    %98 = vector.broadcast %0 : f32 to vector<1x128xf32>
    %99 = arith.mulf %98, %97 : vector<1x128xf32>
    %100 = arith.addf %92, %99 : vector<1x128xf32>
    %c0_46 = arith.constant 0 : index
    %c0_47 = arith.constant 0 : index
    %101 = vector.load %arg16[%c0_46, %c0_47] : memref<1x128xf32, #tpu.memory_space<vmem>>, vector<1x128xf32>
    %102 = vector.broadcast %4 : f32 to vector<1x128xf32>
    %103 = arith.mulf %102, %101 : vector<1x128xf32>
    %104 = arith.addf %100, %103 : vector<1x128xf32>
    %c0_48 = arith.constant 0 : index
    %c0_49 = arith.constant 0 : index
    %105 = vector.load %arg22[%c0_48, %c0_49] : memref<1x128xf32, #tpu.memory_space<vmem>>, vector<1x128xf32>
    tpu.vector_store %arg22[%c0_48, %c0_49], %104 {strides = array<i32>} : memref<1x128xf32, #tpu.memory_space<vmem>>, vector<1x128xf32>,
    %c0_50 = arith.constant 0 : index
    %c0_51 = arith.constant 0 : index
    %106 = vector.load %arg13[%c0_50, %c0_51] : memref<128x128xf32, #tpu.memory_space<vmem>>, vector<128x128xf32>
    %cst_52 = arith.constant 0.949999988 : f32
    %107 = vector.broadcast %cst_52 : f32 to vector<128x128xf32>
    %108 = arith.mulf %107, %106 : vector<128x128xf32>
    %c0_53 = arith.constant 0 : index
    %c0_54 = arith.constant 0 : index
    %109 = vector.load %arg9[%c0_53, %c0_54] : memref<128x128xf32, #tpu.memory_space<vmem>>, vector<128x128xf32>
    %110 = arith.subf %9, %109 : vector<128x128xf32>
    %111 = vector.broadcast %2 : f32 to vector<128x128xf32>
    %112 = arith.mulf %110, %111 : vector<128x128xf32>
    %113 = arith.addf %59, %112 : vector<128x128xf32>
    %114 = vector.broadcast %1 : f32 to vector<128x128xf32>
    %115 = arith.mulf %114, %113 : vector<128x128xf32>
    %116 = arith.addf %108, %115 : vector<128x128xf32>
    %c0_55 = arith.constant 0 : index
    %c0_56 = arith.constant 0 : index
    %117 = vector.load %arg17[%c0_55, %c0_56] : memref<128x128xf32, #tpu.memory_space<vmem>>, vector<128x128xf32>
    %118 = vector.broadcast %5 : f32 to vector<128x128xf32>
    %119 = arith.mulf %118, %117 : vector<128x128xf32>
    %120 = arith.addf %116, %119 : vector<128x128xf32>
    %c0_57 = arith.constant 0 : index
    %c0_58 = arith.constant 0 : index
    %121 = vector.load %arg23[%c0_57, %c0_58] : memref<128x128xf32, #tpu.memory_space<vmem>>, vector<128x128xf32>
    tpu.vector_store %arg23[%c0_57, %c0_58], %120 {strides = array<i32>} : memref<128x128xf32, #tpu.memory_space<vmem>>, vector<128x128xf32>,
    %c0_59 = arith.constant 0 : index
    %c0_60 = arith.constant 0 : index
    %122 = vector.load %arg14[%c0_59, %c0_60] : memref<1x128xf32, #tpu.memory_space<vmem>>, vector<1x128xf32>
    %cst_61 = arith.constant 0.949999988 : f32
    %123 = vector.broadcast %cst_61 : f32 to vector<1x128xf32>
    %124 = arith.mulf %123, %122 : vector<1x128xf32>
    %c0_62 = arith.constant 0 : index
    %c0_63 = arith.constant 0 : index
    %125 = vector.load %arg10[%c0_62, %c0_63] : memref<1x128xf32, #tpu.memory_space<vmem>>, vector<1x128xf32>
    %126 = arith.subf %10, %125 : vector<1x128xf32>
    %127 = vector.broadcast %3 : f32 to vector<1x128xf32>
    %128 = arith.mulf %126, %127 : vector<1x128xf32>
    %129 = arith.addf %61, %128 : vector<1x128xf32>
    %130 = vector.broadcast %1 : f32 to vector<1x128xf32>
    %131 = arith.mulf %130, %129 : vector<1x128xf32>
    %132 = arith.addf %124, %131 : vector<1x128xf32>
    %c0_64 = arith.constant 0 : index
    %c0_65 = arith.constant 0 : index
    %133 = vector.load %arg18[%c0_64, %c0_65] : memref<1x128xf32, #tpu.memory_space<vmem>>, vector<1x128xf32>
    %134 = vector.broadcast %5 : f32 to vector<1x128xf32>
    %135 = arith.mulf %134, %133 : vector<1x128xf32>
    %136 = arith.addf %132, %135 : vector<1x128xf32>
    %c0_66 = arith.constant 0 : index
    %c0_67 = arith.constant 0 : index
    %137 = vector.load %arg24[%c0_66, %c0_67] : memref<1x128xf32, #tpu.memory_space<vmem>>, vector<1x128xf32>
    tpu.vector_store %arg24[%c0_66, %c0_67], %136 {strides = array<i32>} : memref<1x128xf32, #tpu.memory_space<vmem>>, vector<1x128xf32>,
    return
  }
}

</mosaic_0001>

<llo_original>
// kernel: step.1
$region0: #{step.1}
  #allocation0 [shape = 'u32[]', space=smem, size = 0x4, offset = 0x4, fixed_abs, tag = 'smem constant byte address 0x4 - core index']
  #allocation1 [shape = 'u32[144,128]{1,0:T(1,128)}', space=vmem, size = 0x12000, scoped, tag = 'internal scratch']
  %s0 = inlined_call_operand.vmem [shape: f32[6], index: 0, kind: input, shape index: {}]
  %s1 = inlined_call_operand.vmem [shape: f32[8,128], index: 1, kind: input, shape index: {}]
  %s2 = inlined_call_operand.vmem [shape: s32[8,1], index: 2, kind: input, shape index: {}]
  %s3 = inlined_call_operand.vmem [shape: f32[128,128], index: 3, kind: input, shape index: {}]
  %s4 = inlined_call_operand.vmem [shape: f32[1,128], index: 4, kind: input, shape index: {}]
  %s5 = inlined_call_operand.vmem [shape: f32[128,128], index: 5, kind: input, shape index: {}]
  %s6 = inlined_call_operand.vmem [shape: f32[1,128], index: 6, kind: input, shape index: {}]
  %s7 = inlined_call_operand.vmem [shape: f32[128,128], index: 7, kind: input, shape index: {}]
  %s8 = inlined_call_operand.vmem [shape: f32[1,128], index: 8, kind: input, shape index: {}]
  %s9 = inlined_call_operand.vmem [shape: f32[128,128], index: 9, kind: input, shape index: {}]
  %s10 = inlined_call_operand.vmem [shape: f32[1,128], index: 10, kind: input, shape index: {}]
  %s11 = inlined_call_operand.vmem [shape: f32[128,128], index: 11, kind: input, shape index: {}, may-alias: {11,21}]
  %s12 = inlined_call_operand.vmem [shape: f32[1,128], index: 12, kind: input, shape index: {}, may-alias: {12,22}]
  %s13 = inlined_call_operand.vmem [shape: f32[128,128], index: 13, kind: input, shape index: {}, may-alias: {13,23}]
  %s14 = inlined_call_operand.vmem [shape: f32[1,128], index: 14, kind: input, shape index: {}, may-alias: {14,24}]
  %s15 = inlined_call_operand.vmem [shape: f32[128,128], index: 15, kind: input, shape index: {}]
  %s16 = inlined_call_operand.vmem [shape: f32[1,128], index: 16, kind: input, shape index: {}]
  %s17 = inlined_call_operand.vmem [shape: f32[128,128], index: 17, kind: input, shape index: {}]
  %s18 = inlined_call_operand.vmem [shape: f32[1,128], index: 18, kind: input, shape index: {}]
  %s19 = inlined_call_operand.hbm [shape: f32[8,128], index: 19, kind: output, shape index: {0}]
  %s20 = inlined_call_operand.hbm [shape: f32[1,1], index: 20, kind: output, shape index: {1}]
  %s21 = inlined_call_operand.vmem [shape: f32[128,128], index: 21, kind: output, shape index: {2}, may-alias: {11,21}]
  %s22 = inlined_call_operand.vmem [shape: f32[1,128], index: 22, kind: output, shape index: {3}, may-alias: {12,22}]
  %s23 = inlined_call_operand.vmem [shape: f32[128,128], index: 23, kind: output, shape index: {4}, may-alias: {13,23}]
  %s24 = inlined_call_operand.vmem [shape: f32[1,128], index: 24, kind: output, shape index: {5}, may-alias: {14,24}]
  %25 = xla_tuple %s19, %s20, %s21, %s22, %s23, %s24
  %s26 = sld [smem:[#allocation0]]
  $region130: #{step.1} parent=0
    _
  %s28 = ssub.s32 1, %s26
  %s29 = scalar_select 0, %s28, %s26
  $region1: #{step.1} parent=0
    #allocation2 [shape = 'u8[512]{0}', space=smem, size = 0x200, scoped, tag = 'input window, operand 0, single buffered']
    #allocation3 [shape = 's32[1]{0}', space=sflag, size = 0x4, scoped, tag = 'scoped memory for step.1']
    #allocation4 [shape = 's32[1]{0}', space=sflag, size = 0x4, scoped, tag = 'scoped memory for step.1']
    #allocation5 [shape = 'u8[4096]{0}', space=vmem, size = 0x1000, scoped, tag = 'output window, operand 0, single buffered']
    #allocation6 [shape = 'u8[512]{0}', space=vmem, size = 0x400, scoped, tag = 'output window, operand 1, single buffered']
    #allocation7 [shape = 's32[1]{0}', space=sflag, size = 0x4, scoped, tag = 'scoped memory for step.1']
    %30 = vsyncpa [#allocation4], 0
    %31 = vsyncpa [#allocation3], 0
    %32 = vsyncpa [#allocation7], 0
    // Predicated region
    $region2: #{step.1} parent=1 // pred_check
      _
    $region3: #{step.1} parent=1 // pred_check_branch
      %34 = sbr.rel (0) target = $region5
    $region4: #{step.1} parent=1 // pred_region
      %s36 = ssub.s32 16, 16
      %37 = vsyncadd [#allocation4], %s36
      %s39 = sshll.u32 %s0, 4
      %s40 = int_to_ptr.vmem [resolvable:$true] %s39
      %42 = dma.vmem_to_smem %s40, 16, [#allocation2], [#allocation4]
    $region5: #{step.1} parent=1 // pred_fallthru
      _
    // Predicated region
    $region6: #{step.1} parent=1 // pred_check
      _
    $region7: #{step.1} parent=1 // pred_check_branch
      %44 = sbr.rel (0) target = $region9
    $region8: #{step.1} parent=1 // pred_region
      _
    $region9: #{step.1} parent=1 // pred_fallthru
      _
    // Predicated region
    $region10: #{step.1} parent=1 // pred_check
      _
    $region11: #{step.1} parent=1 // pred_check_branch
      %46 = sbr.rel (0) target = $region13
    $region12: #{step.1} parent=1 // pred_region
      _
    $region13: #{step.1} parent=1 // pred_fallthru
      _
    // Predicated region
    $region14: #{step.1} parent=1 // pred_check
      _
    $region15: #{step.1} parent=1 // pred_check_branch
      %48 = sbr.rel (0) target = $region17
    $region16: #{step.1} parent=1 // pred_region
      _
    $region17: #{step.1} parent=1 // pred_fallthru
      _
    // Predicated region
    $region18: #{step.1} parent=1 // pred_check
      _
    $region19: #{step.1} parent=1 // pred_check_branch
      %50 = sbr.rel (0) target = $region21
    $region20: #{step.1} parent=1 // pred_region
      _
    $region21: #{step.1} parent=1 // pred_fallthru
      _
    // Predicated region
    $region22: #{step.1} parent=1 // pred_check
      _
    $region23: #{step.1} parent=1 // pred_check_branch
      %52 = sbr.rel (0) target = $region25
    $region24: #{step.1} parent=1 // pred_region
      _
    $region25: #{step.1} parent=1 // pred_fallthru
      _
    // Predicated region
    $region26: #{step.1} parent=1 // pred_check
      _
    $region27: #{step.1} parent=1 // pred_check_branch
      %54 = sbr.rel (0) target = $region29
    $region28: #{step.1} parent=1 // pred_region
      _
    $region29: #{step.1} parent=1 // pred_fallthru
      _
    // Predicated region
    $region30: #{step.1} parent=1 // pred_check
      _
    $region31: #{step.1} parent=1 // pred_check_branch
      %56 = sbr.rel (0) target = $region33
    $region32: #{step.1} parent=1 // pred_region
      _
    $region33: #{step.1} parent=1 // pred_fallthru
      _
    // Predicated region
    $region34: #{step.1} parent=1 // pred_check
      _
    $region35: #{step.1} parent=1 // pred_check_branch
      %58 = sbr.rel (0) target = $region37
    $region36: #{step.1} parent=1 // pred_region
      _
    $region37: #{step.1} parent=1 // pred_fallthru
      _
    // Predicated region
    $region38: #{step.1} parent=1 // pred_check
      _
    $region39: #{step.1} parent=1 // pred_check_branch
      %60 = sbr.rel (0) target = $region41
    $region40: #{step.1} parent=1 // pred_region
      _
    $region41: #{step.1} parent=1 // pred_fallthru
      _
    // Predicated region
    $region42: #{step.1} parent=1 // pred_check
      _
    $region43: #{step.1} parent=1 // pred_check_branch
      %62 = sbr.rel (0) target = $region45
    $region44: #{step.1} parent=1 // pred_region
      _
    $region45: #{step.1} parent=1 // pred_fallthru
      _
    // Predicated region
    $region46: #{step.1} parent=1 // pred_check
      _
    $region47: #{step.1} parent=1 // pred_check_branch
      %64 = sbr.rel (0) target = $region49
    $region48: #{step.1} parent=1 // pred_region
      _
    $region49: #{step.1} parent=1 // pred_fallthru
      _
    // Predicated region
    $region50: #{step.1} parent=1 // pred_check
      _
    $region51: #{step.1} parent=1 // pred_check_branch
      %66 = sbr.rel (0) target = $region53
    $region52: #{step.1} parent=1 // pred_region
      _
    $region53: #{step.1} parent=1 // pred_fallthru
      _
    // Predicated region
    $region54: #{step.1} parent=1 // pred_check
      _
    $region55: #{step.1} parent=1 // pred_check_branch
      %68 = sbr.rel (0) target = $region57
    $region56: #{step.1} parent=1 // pred_region
      _
    $region57: #{step.1} parent=1 // pred_fallthru
      _
    // Predicated region
    $region58: #{step.1} parent=1 // pred_check
      _
    $region59: #{step.1} parent=1 // pred_check_branch
      %70 = sbr.rel (0) target = $region61
    $region60: #{step.1} parent=1 // pred_region
      _
    $region61: #{step.1} parent=1 // pred_fallthru
      _
    // Predicated region
    $region62: #{step.1} parent=1 // pred_check
      _
    $region63: #{step.1} parent=1 // pred_check_branch
      %72 = sbr.rel (0) target = $region65
    $region64: #{step.1} parent=1 // pred_region
      _
    $region65: #{step.1} parent=1 // pred_fallthru
      _
    // Predicated region
    $region66: #{step.1} parent=1 // pred_check
      _
    $region67: #{step.1} parent=1 // pred_check_branch
      %74 = sbr.rel (0) target = $region69
    $region68: #{step.1} parent=1 // pred_region
      _
    $region69: #{step.1} parent=1 // pred_fallthru
      _
    // Predicated region
    $region70: #{step.1} parent=1 // pred_check
      _
    $region71: #{step.1} parent=1 // pred_check_branch
      %76 = sbr.rel (0) target = $region73
    $region72: #{step.1} parent=1 // pred_region
      _
    $region73: #{step.1} parent=1 // pred_fallthru
      _
    // Predicated region
    $region74: #{step.1} parent=1 // pred_check
      _
    $region75: #{step.1} parent=1 // pred_check_branch
      %78 = sbr.rel (0) target = $region77
    $region76: #{step.1} parent=1 // pred_region
      _
    $region77: #{step.1} parent=1 // pred_fallthru
      _
    // Predicated region
    $region78: #{step.1} parent=1 // pred_check
      _
    $region79: #{step.1} parent=1 // pred_check_branch
      %80 = sbr.rel (0) target = $region81
    $region80: #{step.1} parent=1 // pred_region
      %81 = dma.done [#allocation4], 16
    $region81: #{step.1} parent=1 // pred_fallthru
      _
    %82 = sfence
    %s84 = sld [smem:[#allocation2]]
    %s85 = sld [smem:[#allocation2 + $0x1]]
    %s86 = sld [smem:[#allocation2 + $0x2]]
    %s87 = sld [smem:[#allocation2 + $0x3]]
    %s88 = sld [smem:[#allocation2 + $0x4]]
    %s89 = sld [smem:[#allocation2 + $0x5]]
    %v90 = vld [vmem:[%s1] sm:$0xff]
    %v91 = vld [vmem:[%s3] sm:$0xff]
    %v92 = vld [vmem:[%s3 + $0x8] sm:$0xff]
    %v93 = vld [vmem:[%s3 + $0x10] sm:$0xff]
    %v94 = vld [vmem:[%s3 + $0x18] sm:$0xff]
    %v95 = vld [vmem:[%s3 + $0x20] sm:$0xff]
    %v96 = vld [vmem:[%s3 + $0x28] sm:$0xff]
    %v97 = vld [vmem:[%s3 + $0x30] sm:$0xff]
    %v98 = vld [vmem:[%s3 + $0x38] sm:$0xff]
    %v99 = vld [vmem:[%s3 + $0x40] sm:$0xff]
    %v100 = vld [vmem:[%s3 + $0x48] sm:$0xff]
    %v101 = vld [vmem:[%s3 + $0x50] sm:$0xff]
    %v102 = vld [vmem:[%s3 + $0x58] sm:$0xff]
    %v103 = vld [vmem:[%s3 + $0x60] sm:$0xff]
    %v104 = vld [vmem:[%s3 + $0x68] sm:$0xff]
    %v105 = vld [vmem:[%s3 + $0x70] sm:$0xff]
    %v106 = vld [vmem:[%s3 + $0x78] sm:$0xff]
    %v107 = vld [vmem:[%s4] sm:$0x1]
    %v108 = vld [vmem:[%s5] sm:$0xff]
    %v109 = vld [vmem:[%s5 + $0x8] sm:$0xff]
    %v110 = vld [vmem:[%s5 + $0x10] sm:$0xff]
    %v111 = vld [vmem:[%s5 + $0x18] sm:$0xff]
    %v112 = vld [vmem:[%s5 + $0x20] sm:$0xff]
    %v113 = vld [vmem:[%s5 + $0x28] sm:$0xff]
    %v114 = vld [vmem:[%s5 + $0x30] sm:$0xff]
    %v115 = vld [vmem:[%s5 + $0x38] sm:$0xff]
    %v116 = vld [vmem:[%s5 + $0x40] sm:$0xff]
    %v117 = vld [vmem:[%s5 + $0x48] sm:$0xff]
    %v118 = vld [vmem:[%s5 + $0x50] sm:$0xff]
    %v119 = vld [vmem:[%s5 + $0x58] sm:$0xff]
    %v120 = vld [vmem:[%s5 + $0x60] sm:$0xff]
    %v121 = vld [vmem:[%s5 + $0x68] sm:$0xff]
    %v122 = vld [vmem:[%s5 + $0x70] sm:$0xff]
    %v123 = vld [vmem:[%s5 + $0x78] sm:$0xff]
    %v124 = vld [vmem:[%s6] sm:$0x1]
    %v125 = vpack.c.bf16 %v90, %v90
    %v126 = vpack.c.bf16 %v92, %v91
    %v127 = vpack.c.bf16 %v94, %v93
    %v128 = vpack.c.bf16 %v96, %v95
    %v129 = vpack.c.bf16 %v98, %v97
    %v130 = vpack.c.bf16 %v100, %v99
    %v131 = vpack.c.bf16 %v102, %v101
    %v132 = vpack.c.bf16 %v104, %v103
    %v133 = vpack.c.bf16 %v106, %v105
    %v135 = vlaneseq
    %v136 = vshrl.u32 %v135, 7
    %v137 = vsub.s32 0, %v136
    %v138 = vrot.slane %v107, %v137
    %140 = vmatprep.subr.bf16.mxu0 0
    %141 = vmatpush1.bf16.xpose.msra.mxu0 %v126
    %142 = vmatprep.subr.bf16.mxu0 0
    %143 = vmatpush1.bf16.xpose.msra.mxu0 %v127
    %144 = vmatprep.subr.bf16.mxu0 0
    %145 = vmatpush1.bf16.xpose.msra.mxu0 %v128
    %146 = vmatprep.subr.bf16.mxu0 0
    %147 = vmatpush1.bf16.xpose.msra.mxu0 %v129
    %148 = vmatprep.subr.bf16.mxu0 0
    %149 = vmatpush1.bf16.xpose.msra.mxu0 %v130
    %150 = vmatprep.subr.bf16.mxu0 0
    %151 = vmatpush1.bf16.xpose.msra.mxu0 %v131
    %152 = vmatprep.subr.bf16.mxu0 0
    %153 = vmatpush1.bf16.xpose.msra.mxu0 %v132
    %154 = vmatprep.subr.bf16.mxu0 0
    %155 = vmatpush1.bf16.xpose.msra.mxu0 %v133
    %156 = vmatprep.subr.bf16.mxu0 0
    %157 = vmatpush1.bf16.xpose.msra.mxu0 0
    %158 = vmatprep.subr.bf16.mxu0 0
    %159 = vmatpush1.bf16.xpose.msra.mxu0 0
    %160 = vmatprep.subr.bf16.mxu0 0
    %161 = vmatpush1.bf16.xpose.msra.mxu0 0
    %162 = vmatprep.subr.bf16.mxu0 0
    %163 = vmatpush1.bf16.xpose.msra.mxu0 0
    %164 = vmatprep.subr.bf16.mxu0 0
    %165 = vmatpush1.bf16.xpose.msra.mxu0 0
    %166 = vmatprep.subr.bf16.mxu0 0
    %167 = vmatpush1.bf16.xpose.msra.mxu0 0
    %168 = vmatprep.subr.bf16.mxu0 0
    %169 = vmatpush1.bf16.xpose.msra.mxu0 0
    %170 = vmatprep.subr.bf16.mxu0 0
    %171 = vmatpush1.bf16.xpose.msra.mxu0 0
    %172 = vmatprep.mubr.bf16.mxu0 0
    %173 = vmatmul.mubr.bf16.gmra.mrb[0].mxu0 %v125
    %v174 = vpop.f32.mrb[0].mxu0
    %v175 = vadd.f32 %v138, %v174
    %v176 = vpop.f32.mrb[0].mxu0
    %v177 = vpop.f32.mrb[0].mxu0
    %v178 = vpop.f32.mrb[0].mxu0
    %179 = vdwg.mxu0
    %v180 = vmax.f32 %v175, 0.0
    %v181 = vpack.c.bf16 %v180, %v180
    %v182 = vpack.c.bf16 %v109, %v108
    %v183 = vpack.c.bf16 %v111, %v110
    %v184 = vpack.c.bf16 %v113, %v112
    %v185 = vpack.c.bf16 %v115, %v114
    %v186 = vpack.c.bf16 %v117, %v116
    %v187 = vpack.c.bf16 %v119, %v118
    %v188 = vpack.c.bf16 %v121, %v120
    %v189 = vpack.c.bf16 %v123, %v122
    %v191 = vlaneseq
    %v192 = vshrl.u32 %v191, 7
    %v193 = vsub.s32 0, %v192
    %v194 = vrot.slane %v124, %v193
    %196 = vmatprep.subr.bf16.mxu0 0
    %197 = vmatpush1.bf16.xpose.msra.mxu0 %v182
    %198 = vmatprep.subr.bf16.mxu0 0
    %199 = vmatpush1.bf16.xpose.msra.mxu0 %v183
    %200 = vmatprep.subr.bf16.mxu0 0
    %201 = vmatpush1.bf16.xpose.msra.mxu0 %v184
    %202 = vmatprep.subr.bf16.mxu0 0
    %203 = vmatpush1.bf16.xpose.msra.mxu0 %v185
    %204 = vmatprep.subr.bf16.mxu0 0
    %205 = vmatpush1.bf16.xpose.msra.mxu0 %v186
    %206 = vmatprep.subr.bf16.mxu0 0
    %207 = vmatpush1.bf16.xpose.msra.mxu0 %v187
    %208 = vmatprep.subr.bf16.mxu0 0
    %209 = vmatpush1.bf16.xpose.msra.mxu0 %v188
    %210 = vmatprep.subr.bf16.mxu0 0
    %211 = vmatpush1.bf16.xpose.msra.mxu0 %v189
    %212 = vmatprep.subr.bf16.mxu0 0
    %213 = vmatpush1.bf16.xpose.msra.mxu0 0
    %214 = vmatprep.subr.bf16.mxu0 0
    %215 = vmatpush1.bf16.xpose.msra.mxu0 0
    %216 = vmatprep.subr.bf16.mxu0 0
    %217 = vmatpush1.bf16.xpose.msra.mxu0 0
    %218 = vmatprep.subr.bf16.mxu0 0
    %219 = vmatpush1.bf16.xpose.msra.mxu0 0
    %220 = vmatprep.subr.bf16.mxu0 0
    %221 = vmatpush1.bf16.xpose.msra.mxu0 0
    %222 = vmatprep.subr.bf16.mxu0 0
    %223 = vmatpush1.bf16.xpose.msra.mxu0 0
    %224 = vmatprep.subr.bf16.mxu0 0
    %225 = vmatpush1.bf16.xpose.msra.mxu0 0
    %226 = vmatprep.subr.bf16.mxu0 0
    %227 = vmatpush1.bf16.xpose.msra.mxu0 0
    %228 = vmatprep.mubr.bf16.mxu0 0
    %229 = vmatmul.mubr.bf16.gmra.mrb[0].mxu0 %v181
    %v230 = vpop.f32.mrb[0].mxu0
    %v231 = vadd.f32 %v194, %v230
    %v232 = vpop.f32.mrb[0].mxu0
    %v233 = vpop.f32.mrb[0].mxu0
    %v234 = vpop.f32.mrb[0].mxu0
    %235 = vdwg.mxu0
    %236 = vst [vmem:[#allocation5] sm:$0xff] %v231
    %v237 = vlaneseq
    %v238 = vand.u32 %v237, 127
    %vm239 = vcmp.lt.s32.totalorder %v238, 16
    %v240 = vsel %vm239, %v231, -1e+30
    %v241 = vld [vmem:[%s2] sm:$0xff]
    %242 = vset.pattern.permute.xlu0 0
    %243 = vperm.xlu0 %242, %v241
    %v244 = vpop.permute.xlu0 %243
    %vm245 = vcmp.eq.s32.totalorder %v238, %v244
    %v246 = vsel %vm245, 1, 0
    %v247 = vcvt.s32.f32 %v246
    %248 = vmax.xlane.f32.xlu0 %v240
    %v249 = vpop.xlane.xlu0 %248
    %v250 = vsub.f32 %v240, %v249
    %v251 = vmul.f32 %v250, 1.442695
    %v252 = vpow.pop %v251
    %253 = vadd.xlane.f32.xlu0 %v252
    %v254 = vpop.xlane.xlu0 %253
    %v255 = vlog2.pop %v254
    %v256 = vmul.f32 %v255, 0.6931472
    %v257 = vadd.f32 %v249, %v256
    %v258 = vmul.f32 %v240, %v247
    %259 = vadd.xlane.f32.xlu0 %v258
    %v260 = vpop.xlane.xlu0 %259
    %v261 = vsub.f32 %v257, %v260
    %v262 = vrot.slane %v261, 4
    %v263 = vadd.f32 %v261, %v262
    %v264 = vrot.slane %v263, 2
    %v265 = vadd.f32 %v263, %v264
    %v266 = vrot.slane %v265, 1
    %v267 = vadd.f32 %v265, %v266
    %v268 = vmul.f32 %v267, 0.125
    %vm269 = vcmask 0
    %270 = vst.msk [vmem:[#allocation6] sm:$0x1] %vm269, %v268
    %v271 = vrcp.pop %v254
    %v272 = vmul.f32 %v252, %v271
    %v273 = vsub.f32 %v272, %v247
    %v274 = vmul.f32 %v273, 0.125
    %v275 = vpack.c.bf16 %v274, %v274
    %v276 = vrot.slane %v274, 4
    %v277 = vadd.f32 %v274, %v276
    %v278 = vrot.slane %v277, 2
    %v279 = vadd.f32 %v277, %v278
    %v280 = vrot.slane %v279, 1
    %v281 = vadd.f32 %v279, %v280
    %282 = vmatprep.subr.bf16.mxu0 0
    %283 = vmatpush1.bf16.msra.mxu0 %v182
    %284 = vmatprep.subr.bf16.mxu0 0
    %285 = vmatpush1.bf16.msra.mxu0 %v183
    %286 = vmatprep.subr.bf16.mxu0 0
    %287 = vmatpush1.bf16.msra.mxu0 %v184
    %288 = vmatprep.subr.bf16.mxu0 0
    %289 = vmatpush1.bf16.msra.mxu0 %v185
    %290 = vmatprep.subr.bf16.mxu0 0
    %291 = vmatpush1.bf16.msra.mxu0 %v186
    %292 = vmatprep.subr.bf16.mxu0 0
    %293 = vmatpush1.bf16.msra.mxu0 %v187
    %294 = vmatprep.subr.bf16.mxu0 0
    %295 = vmatpush1.bf16.msra.mxu0 %v188
    %296 = vmatprep.subr.bf16.mxu0 0
    %297 = vmatpush1.bf16.msra.mxu0 %v189
    %298 = vmatprep.subr.bf16.mxu0 0
    %299 = vmatpush1.bf16.msra.mxu0 0
    %300 = vmatprep.subr.bf16.mxu0 0
    %301 = vmatpush1.bf16.msra.mxu0 0
    %302 = vmatprep.subr.bf16.mxu0 0
    %303 = vmatpush1.bf16.msra.mxu0 0
    %304 = vmatprep.subr.bf16.mxu0 0
    %305 = vmatpush1.bf16.msra.mxu0 0
    %306 = vmatprep.subr.bf16.mxu0 0
    %307 = vmatpush1.bf16.msra.mxu0 0
    %308 = vmatprep.subr.bf16.mxu0 0
    %309 = vmatpush1.bf16.msra.mxu0 0
    %310 = vmatprep.subr.bf16.mxu0 0
    %311 = vmatpush1.bf16.msra.mxu0 0
    %312 = vmatprep.subr.bf16.mxu0 0
    %313 = vmatpush1.bf16.msra.mxu0 0
    %314 = vmatprep.mubr.bf16.mxu0 0
    %315 = vmatmul.mubr.bf16.gmra.mrb[0].mxu0 %v275
    %v316 = vpop.f32.mrb[0].mxu0
    %v317 = vadd.f32 0.0, %v316
    %v318 = vpop.f32.mrb[0].mxu0
    %v319 = vpop.f32.mrb[0].mxu0
    %v320 = vpop.f32.mrb[0].mxu0
    %321 = vdwg.mxu0
    %vm322 = vcmp.gt.f32.partialorder %v175, 0.0
    %v323 = vsel %vm322, %v317, 0.0
    %v324 = vpack.c.bf16 %v323, %v323
    %v325 = vrot.slane %v323, 4
    %v326 = vadd.f32 %v323, %v325
    %v327 = vrot.slane %v326, 2
    %v328 = vadd.f32 %v326, %v327
    %v329 = vrot.slane %v328, 1
    %v330 = vadd.f32 %v328, %v329
    %v331 = vld [vmem:[%s11] sm:$0xff]
    %v332 = vld [vmem:[%s11 + $0x8] sm:$0xff]
    %v333 = vld [vmem:[%s11 + $0x10] sm:$0xff]
    %v334 = vld [vmem:[%s11 + $0x18] sm:$0xff]
    %v335 = vld [vmem:[%s11 + $0x20] sm:$0xff]
    %v336 = vld [vmem:[%s11 + $0x28] sm:$0xff]
    %v337 = vld [vmem:[%s11 + $0x30] sm:$0xff]
    %v338 = vld [vmem:[%s11 + $0x38] sm:$0xff]
    %v339 = vld [vmem:[%s11 + $0x40] sm:$0xff]
    %v340 = vld [vmem:[%s11 + $0x48] sm:$0xff]
    %v341 = vld [vmem:[%s11 + $0x50] sm:$0xff]
    %v342 = vld [vmem:[%s11 + $0x58] sm:$0xff]
    %v343 = vld [vmem:[%s11 + $0x60] sm:$0xff]
    %v344 = vld [vmem:[%s11 + $0x68] sm:$0xff]
    %v345 = vld [vmem:[%s11 + $0x70] sm:$0xff]
    %v346 = vld [vmem:[%s11 + $0x78] sm:$0xff]
    %v347 = vmul.f32 %v331, 0.95
    %v348 = vmul.f32 %v332, 0.95
    %v349 = vmul.f32 %v333, 0.95
    %v350 = vmul.f32 %v334, 0.95
    %v351 = vmul.f32 %v335, 0.95
    %v352 = vmul.f32 %v336, 0.95
    %v353 = vmul.f32 %v337, 0.95
    %v354 = vmul.f32 %v338, 0.95
    %v355 = vmul.f32 %v339, 0.95
    %v356 = vmul.f32 %v340, 0.95
    %v357 = vmul.f32 %v341, 0.95
    %v358 = vmul.f32 %v342, 0.95
    %v359 = vmul.f32 %v343, 0.95
    %v360 = vmul.f32 %v344, 0.95
    %v361 = vmul.f32 %v345, 0.95
    %v362 = vmul.f32 %v346, 0.95
    %v363 = vld [vmem:[%s7] sm:$0xff]
    %v364 = vld [vmem:[%s7 + $0x8] sm:$0xff]
    %v365 = vld [vmem:[%s7 + $0x10] sm:$0xff]
    %v366 = vld [vmem:[%s7 + $0x18] sm:$0xff]
    %v367 = vld [vmem:[%s7 + $0x20] sm:$0xff]
    %v368 = vld [vmem:[%s7 + $0x28] sm:$0xff]
    %v369 = vld [vmem:[%s7 + $0x30] sm:$0xff]
    %v370 = vld [vmem:[%s7 + $0x38] sm:$0xff]
    %v371 = vld [vmem:[%s7 + $0x40] sm:$0xff]
    %v372 = vld [vmem:[%s7 + $0x48] sm:$0xff]
    %v373 = vld [vmem:[%s7 + $0x50] sm:$0xff]
    %v374 = vld [vmem:[%s7 + $0x58] sm:$0xff]
    %v375 = vld [vmem:[%s7 + $0x60] sm:$0xff]
    %v376 = vld [vmem:[%s7 + $0x68] sm:$0xff]
    %v377 = vld [vmem:[%s7 + $0x70] sm:$0xff]
    %v378 = vld [vmem:[%s7 + $0x78] sm:$0xff]
    %v379 = vsub.f32 %v91, %v363
    %v380 = vsub.f32 %v92, %v364
    %v381 = vsub.f32 %v93, %v365
    %v382 = vsub.f32 %v94, %v366
    %v383 = vsub.f32 %v95, %v367
    %v384 = vsub.f32 %v96, %v368
    %v385 = vsub.f32 %v97, %v369
    %v386 = vsub.f32 %v98, %v370
    %v387 = vsub.f32 %v99, %v371
    %v388 = vsub.f32 %v100, %v372
    %v389 = vsub.f32 %v101, %v373
    %v390 = vsub.f32 %v102, %v374
    %v391 = vsub.f32 %v103, %v375
    %v392 = vsub.f32 %v104, %v376
    %v393 = vsub.f32 %v105, %v377
    %v394 = vsub.f32 %v106, %v378
    %v395 = vstv %s86
    %v396 = vmul.f32 %v379, %v395
    %v397 = vmul.f32 %v380, %v395
    %v398 = vmul.f32 %v381, %v395
    %v399 = vmul.f32 %v382, %v395
    %v400 = vmul.f32 %v383, %v395
    %v401 = vmul.f32 %v384, %v395
    %v402 = vmul.f32 %v385, %v395
    %v403 = vmul.f32 %v386, %v395
    %v404 = vmul.f32 %v387, %v395
    %v405 = vmul.f32 %v388, %v395
    %v406 = vmul.f32 %v389, %v395
    %v407 = vmul.f32 %v390, %v395
    %v408 = vmul.f32 %v391, %v395
    %v409 = vmul.f32 %v392, %v395
    %v410 = vmul.f32 %v393, %v395
    %v411 = vmul.f32 %v394, %v395
    %412 = vxpose.xlu0.c.b16.start [1/8] %v324, 128
    %413 = vxpose.xlu0.c.b16.cont [2/8] 0, 128
    %414 = vxpose.xlu0.c.b16.cont [3/8] 0, 128
    %415 = vxpose.xlu0.c.b16.cont [4/8] 0, 128
    %416 = vxpose.xlu0.c.b16.cont [5/8] 0, 128
    %417 = vxpose.xlu0.c.b16.cont [6/8] 0, 128
    %418 = vxpose.xlu0.c.b16.cont [7/8] 0, 128
    %419 = vxpose.xlu0.c.b16.end [8/8] 0, 128
    %v420 = vpop.trf.xlu0
    %v421 = vpop.trf.xlu0
    %v422 = vpop.trf.xlu0
    %v423 = vpop.trf.xlu0
    %v424 = vpop.trf.xlu0
    %v425 = vpop.trf.xlu0
    %v426 = vpop.trf.xlu0
    %v427 = vpop.trf.xlu0
    %vm428 = vcmask 64512
    %v430 = vsel %vm428, %v420, 0
    %v433 = vsel %vm428, %v421, 0
    %v436 = vsel %vm428, %v422, 0
    %v439 = vsel %vm428, %v423, 0
    %v442 = vsel %vm428, %v424, 0
    %v445 = vsel %vm428, %v425, 0
    %v448 = vsel %vm428, %v426, 0
    %v451 = vsel %vm428, %v427, 0
    %vm453 = vcmask 1043456
    %v455 = vsel %vm453, %v125, 0
    %457 = vmatprep.subr.bf16.mxu0 0
    %458 = vmatpush1.bf16.msra.mxu0 %v455
    %459 = vmatprep.subr.bf16.mxu0 0
    %460 = vmatpush1.bf16.msra.mxu0 0
    %461 = vmatprep.subr.bf16.mxu0 0
    %462 = vmatpush1.bf16.msra.mxu0 0
    %463 = vmatprep.subr.bf16.mxu0 0
    %464 = vmatpush1.bf16.msra.mxu0 0
    %465 = vmatprep.subr.bf16.mxu0 0
    %466 = vmatpush1.bf16.msra.mxu0 0
    %467 = vmatprep.subr.bf16.mxu0 0
    %468 = vmatpush1.bf16.msra.mxu0 0
    %469 = vmatprep.subr.bf16.mxu0 0
    %470 = vmatpush1.bf16.msra.mxu0 0
    %471 = vmatprep.subr.bf16.mxu0 0
    %472 = vmatpush1.bf16.msra.mxu0 0
    %473 = vmatprep.subr.bf16.mxu0 0
    %474 = vmatpush1.bf16.msra.mxu0 0
    %475 = vmatprep.subr.bf16.mxu0 0
    %476 = vmatpush1.bf16.msra.mxu0 0
    %477 = vmatprep.subr.bf16.mxu0 0
    %478 = vmatpush1.bf16.msra.mxu0 0
    %479 = vmatprep.subr.bf16.mxu0 0
    %480 = vmatpush1.bf16.msra.mxu0 0
    %481 = vmatprep.subr.bf16.mxu0 0
    %482 = vmatpush1.bf16.msra.mxu0 0
    %483 = vmatprep.subr.bf16.mxu0 0
    %484 = vmatpush1.bf16.msra.mxu0 0
    %485 = vmatprep.subr.bf16.mxu0 0
    %486 = vmatpush1.bf16.msra.mxu0 0
    %487 = vmatprep.subr.bf16.mxu0 0
    %488 = vmatpush1.bf16.msra.mxu0 0
    %489 = vmatprep.mubr.bf16.mxu0 0
    %490 = vmatmul.mubr.bf16.gmra.mrb[0].mxu0 %v430
    %v491 = vpop.f32.mrb[0].mxu0
    %v492 = vadd.f32 %v396, %v491
    %v493 = vpop.f32.mrb[0].mxu0
    %v494 = vpop.f32.mrb[0].mxu0
    %v495 = vadd.f32 %v397, %v494
    %v496 = vpop.f32.mrb[0].mxu0
    %497 = vmatprep.mubr.bf16.mxu0 0
    %498 = vmatmul.mubr.bf16.gmra.mrb[0].mxu0 %v433
    %v499 = vpop.f32.mrb[0].mxu0
    %v500 = vadd.f32 %v398, %v499
    %v501 = vpop.f32.mrb[0].mxu0
    %v502 = vpop.f32.mrb[0].mxu0
    %v503 = vadd.f32 %v399, %v502
    %v504 = vpop.f32.mrb[0].mxu0
    %505 = vmatprep.mubr.bf16.mxu0 0
    %506 = vmatmul.mubr.bf16.gmra.mrb[0].mxu0 %v436
    %v507 = vpop.f32.mrb[0].mxu0
    %v508 = vadd.f32 %v400, %v507
    %v509 = vpop.f32.mrb[0].mxu0
    %v510 = vpop.f32.mrb[0].mxu0
    %v511 = vadd.f32 %v401, %v510
    %v512 = vpop.f32.mrb[0].mxu0
    %513 = vmatprep.mubr.bf16.mxu0 0
    %514 = vmatmul.mubr.bf16.gmra.mrb[0].mxu0 %v439
    %v515 = vpop.f32.mrb[0].mxu0
    %v516 = vadd.f32 %v402, %v515
    %v517 = vpop.f32.mrb[0].mxu0
    %v518 = vpop.f32.mrb[0].mxu0
    %v519 = vadd.f32 %v403, %v518
    %v520 = vpop.f32.mrb[0].mxu0
    %521 = vmatprep.mubr.bf16.mxu0 0
    %522 = vmatmul.mubr.bf16.gmra.mrb[0].mxu0 %v442
    %v523 = vpop.f32.mrb[0].mxu0
    %v524 = vadd.f32 %v404, %v523
    %v525 = vpop.f32.mrb[0].mxu0
    %v526 = vpop.f32.mrb[0].mxu0
    %v527 = vadd.f32 %v405, %v526
    %v528 = vpop.f32.mrb[0].mxu0
    %529 = vmatprep.mubr.bf16.mxu0 0
    %530 = vmatmul.mubr.bf16.gmra.mrb[0].mxu0 %v445
    %v531 = vpop.f32.mrb[0].mxu0
    %v532 = vadd.f32 %v406, %v531
    %v533 = vpop.f32.mrb[0].mxu0
    %v534 = vpop.f32.mrb[0].mxu0
    %v535 = vadd.f32 %v407, %v534
    %v536 = vpop.f32.mrb[0].mxu0
    %537 = vmatprep.mubr.bf16.mxu0 0
    %538 = vmatmul.mubr.bf16.gmra.mrb[0].mxu0 %v448
    %v539 = vpop.f32.mrb[0].mxu0
    %v540 = vadd.f32 %v408, %v539
    %v541 = vpop.f32.mrb[0].mxu0
    %v542 = vpop.f32.mrb[0].mxu0
    %v543 = vadd.f32 %v409, %v542
    %v544 = vpop.f32.mrb[0].mxu0
    %545 = vmatprep.mubr.bf16.mxu0 0
    %546 = vmatmul.mubr.bf16.gmra.mrb[0].mxu0 %v451
    %v547 = vpop.f32.mrb[0].mxu0
    %v548 = vadd.f32 %v410, %v547
    %v549 = vpop.f32.mrb[0].mxu0
    %v550 = vpop.f32.mrb[0].mxu0
    %v551 = vadd.f32 %v411, %v550
    %v552 = vpop.f32.mrb[0].mxu0
    %553 = vdwg.mxu0
    %v554 = vstv %s84
    %v555 = vmul.f32 %v554, %v492
    %v556 = vmul.f32 %v554, %v495
    %v557 = vmul.f32 %v554, %v500
    %v558 = vmul.f32 %v554, %v503
    %v559 = vmul.f32 %v554, %v508
    %v560 = vmul.f32 %v554, %v511
    %v561 = vmul.f32 %v554, %v516
    %v562 = vmul.f32 %v554, %v519
    %v563 = vmul.f32 %v554, %v524
    %v564 = vmul.f32 %v554, %v527
    %v565 = vmul.f32 %v554, %v532
    %v566 = vmul.f32 %v554, %v535
    %v567 = vmul.f32 %v554, %v540
    %v568 = vmul.f32 %v554, %v543
    %v569 = vmul.f32 %v554, %v548
    %v570 = vmul.f32 %v554, %v551
    %v571 = vadd.f32 %v347, %v555
    %v572 = vadd.f32 %v348, %v556
    %v573 = vadd.f32 %v349, %v557
    %v574 = vadd.f32 %v350, %v558
    %v575 = vadd.f32 %v351, %v559
    %v576 = vadd.f32 %v352, %v560
    %v577 = vadd.f32 %v353, %v561
    %v578 = vadd.f32 %v354, %v562
    %v579 = vadd.f32 %v355, %v563
    %v580 = vadd.f32 %v356, %v564
    %v581 = vadd.f32 %v357, %v565
    %v582 = vadd.f32 %v358, %v566
    %v583 = vadd.f32 %v359, %v567
    %v584 = vadd.f32 %v360, %v568
    %v585 = vadd.f32 %v361, %v569
    %v586 = vadd.f32 %v362, %v570
    %v587 = vld [vmem:[%s15] sm:$0xff]
    %v588 = vld [vmem:[%s15 + $0x8] sm:$0xff]
    %v589 = vld [vmem:[%s15 + $0x10] sm:$0xff]
    %v590 = vld [vmem:[%s15 + $0x18] sm:$0xff]
    %v591 = vld [vmem:[%s15 + $0x20] sm:$0xff]
    %v592 = vld [vmem:[%s15 + $0x28] sm:$0xff]
    %v593 = vld [vmem:[%s15 + $0x30] sm:$0xff]
    %v594 = vld [vmem:[%s15 + $0x38] sm:$0xff]
    %v595 = vld [vmem:[%s15 + $0x40] sm:$0xff]
    %v596 = vld [vmem:[%s15 + $0x48] sm:$0xff]
    %v597 = vld [vmem:[%s15 + $0x50] sm:$0xff]
    %v598 = vld [vmem:[%s15 + $0x58] sm:$0xff]
    %v599 = vld [vmem:[%s15 + $0x60] sm:$0xff]
    %v600 = vld [vmem:[%s15 + $0x68] sm:$0xff]
    %v601 = vld [vmem:[%s15 + $0x70] sm:$0xff]
    %v602 = vld [vmem:[%s15 + $0x78] sm:$0xff]
    %v603 = vstv %s88
    %v604 = vmul.f32 %v603, %v587
    %v605 = vmul.f32 %v603, %v588
    %v606 = vmul.f32 %v603, %v589
    %v607 = vmul.f32 %v603, %v590
    %v608 = vmul.f32 %v603, %v591
    %v609 = vmul.f32 %v603, %v592
    %v610 = vmul.f32 %v603, %v593
    %v611 = vmul.f32 %v603, %v594
    %v612 = vmul.f32 %v603, %v595
    %v613 = vmul.f32 %v603, %v596
    %v614 = vmul.f32 %v603, %v597
    %v615 = vmul.f32 %v603, %v598
    %v616 = vmul.f32 %v603, %v599
    %v617 = vmul.f32 %v603, %v600
    %v618 = vmul.f32 %v603, %v601
    %v619 = vmul.f32 %v603, %v602
    %v620 = vadd.f32 %v571, %v604
    %v621 = vadd.f32 %v572, %v605
    %v622 = vadd.f32 %v573, %v606
    %v623 = vadd.f32 %v574, %v607
    %v624 = vadd.f32 %v575, %v608
    %v625 = vadd.f32 %v576, %v609
    %v626 = vadd.f32 %v577, %v610
    %v627 = vadd.f32 %v578, %v611
    %v628 = vadd.f32 %v579, %v612
    %v629 = vadd.f32 %v580, %v613
    %v630 = vadd.f32 %v581, %v614
    %v631 = vadd.f32 %v582, %v615
    %v632 = vadd.f32 %v583, %v616
    %v633 = vadd.f32 %v584, %v617
    %v634 = vadd.f32 %v585, %v618
    %v635 = vadd.f32 %v586, %v619
    %636 = vst [vmem:[%s21] sm:$0xff] %v620
    %637 = vst [vmem:[%s21 + $0x8] sm:$0xff] %v621
    %638 = vst [vmem:[%s21 + $0x10] sm:$0xff] %v622
    %639 = vst [vmem:[%s21 + $0x18] sm:$0xff] %v623
    %640 = vst [vmem:[%s21 + $0x20] sm:$0xff] %v624
    %641 = vst [vmem:[%s21 + $0x28] sm:$0xff] %v625
    %642 = vst [vmem:[%s21 + $0x30] sm:$0xff] %v626
    %643 = vst [vmem:[%s21 + $0x38] sm:$0xff] %v627
    %644 = vst [vmem:[%s21 + $0x40] sm:$0xff] %v628
    %645 = vst [vmem:[%s21 + $0x48] sm:$0xff] %v629
    %646 = vst [vmem:[%s21 + $0x50] sm:$0xff] %v630
    %647 = vst [vmem:[%s21 + $0x58] sm:$0xff] %v631
    %648 = vst [vmem:[%s21 + $0x60] sm:$0xff] %v632
    %649 = vst [vmem:[%s21 + $0x68] sm:$0xff] %v633
    %650 = vst [vmem:[%s21 + $0x70] sm:$0xff] %v634
    %651 = vst [vmem:[%s21 + $0x78] sm:$0xff] %v635
    %v652 = vld [vmem:[%s12] sm:$0x1]
    %v653 = vmul.f32 %v652, 0.95
    %v654 = vld [vmem:[%s8] sm:$0x1]
    %v655 = vsub.f32 %v107, %v654
    %v656 = vstv %s87
    %v657 = vmul.f32 %v655, %v656
    %v658 = vadd.f32 %v330, %v657
    %v659 = vmul.f32 %v554, %v658
    %v660 = vadd.f32 %v653, %v659
    %v661 = vld [vmem:[%s16] sm:$0x1]
    %v662 = vmul.f32 %v603, %v661
    %v663 = vadd.f32 %v660, %v662
    %664 = vst [vmem:[%s22] sm:$0x1] %v663
    %v665 = vld [vmem:[%s13] sm:$0xff]
    %v666 = vld [vmem:[%s13 + $0x8] sm:$0xff]
    %v667 = vld [vmem:[%s13 + $0x10] sm:$0xff]
    %v668 = vld [vmem:[%s13 + $0x18] sm:$0xff]
    %v669 = vld [vmem:[%s13 + $0x20] sm:$0xff]
    %v670 = vld [vmem:[%s13 + $0x28] sm:$0xff]
    %v671 = vld [vmem:[%s13 + $0x30] sm:$0xff]
    %v672 = vld [vmem:[%s13 + $0x38] sm:$0xff]
    %v673 = vld [vmem:[%s13 + $0x40] sm:$0xff]
    %v674 = vld [vmem:[%s13 + $0x48] sm:$0xff]
    %v675 = vld [vmem:[%s13 + $0x50] sm:$0xff]
    %v676 = vld [vmem:[%s13 + $0x58] sm:$0xff]
    %v677 = vld [vmem:[%s13 + $0x60] sm:$0xff]
    %v678 = vld [vmem:[%s13 + $0x68] sm:$0xff]
    %v679 = vld [vmem:[%s13 + $0x70] sm:$0xff]
    %v680 = vld [vmem:[%s13 + $0x78] sm:$0xff]
    %v681 = vmul.f32 %v665, 0.95
    %v682 = vmul.f32 %v666, 0.95
    %v683 = vmul.f32 %v667, 0.95
    %v684 = vmul.f32 %v668, 0.95
    %v685 = vmul.f32 %v669, 0.95
    %v686 = vmul.f32 %v670, 0.95
    %v687 = vmul.f32 %v671, 0.95
    %v688 = vmul.f32 %v672, 0.95
    %v689 = vmul.f32 %v673, 0.95
    %v690 = vmul.f32 %v674, 0.95
    %v691 = vmul.f32 %v675, 0.95
    %v692 = vmul.f32 %v676, 0.95
    %v693 = vmul.f32 %v677, 0.95
    %v694 = vmul.f32 %v678, 0.95
    %v695 = vmul.f32 %v679, 0.95
    %v696 = vmul.f32 %v680, 0.95
    %v697 = vld [vmem:[%s9] sm:$0xff]
    %v698 = vld [vmem:[%s9 + $0x8] sm:$0xff]
    %v699 = vld [vmem:[%s9 + $0x10] sm:$0xff]
    %v700 = vld [vmem:[%s9 + $0x18] sm:$0xff]
    %v701 = vld [vmem:[%s9 + $0x20] sm:$0xff]
    %v702 = vld [vmem:[%s9 + $0x28] sm:$0xff]
    %v703 = vld [vmem:[%s9 + $0x30] sm:$0xff]
    %v704 = vld [vmem:[%s9 + $0x38] sm:$0xff]
    %v705 = vld [vmem:[%s9 + $0x40] sm:$0xff]
    %v706 = vld [vmem:[%s9 + $0x48] sm:$0xff]
    %v707 = vld [vmem:[%s9 + $0x50] sm:$0xff]
    %v708 = vld [vmem:[%s9 + $0x58] sm:$0xff]
    %v709 = vld [vmem:[%s9 + $0x60] sm:$0xff]
    %v710 = vld [vmem:[%s9 + $0x68] sm:$0xff]
    %v711 = vld [vmem:[%s9 + $0x70] sm:$0xff]
    %v712 = vld [vmem:[%s9 + $0x78] sm:$0xff]
    %v713 = vsub.f32 %v108, %v697
    %v714 = vsub.f32 %v109, %v698
    %v715 = vsub.f32 %v110, %v699
    %v716 = vsub.f32 %v111, %v700
    %v717 = vsub.f32 %v112, %v701
    %v718 = vsub.f32 %v113, %v702
    %v719 = vsub.f32 %v114, %v703
    %v720 = vsub.f32 %v115, %v704
    %v721 = vsub.f32 %v116, %v705
    %v722 = vsub.f32 %v117, %v706
    %v723 = vsub.f32 %v118, %v707
    %v724 = vsub.f32 %v119, %v708
    %v725 = vsub.f32 %v120, %v709
    %v726 = vsub.f32 %v121, %v710
    %v727 = vsub.f32 %v122, %v711
    %v728 = vsub.f32 %v123, %v712
    %v729 = vmul.f32 %v713, %v395
    %v730 = vmul.f32 %v714, %v395
    %v731 = vmul.f32 %v715, %v395
    %v732 = vmul.f32 %v716, %v395
    %v733 = vmul.f32 %v717, %v395
    %v734 = vmul.f32 %v718, %v395
    %v735 = vmul.f32 %v719, %v395
    %v736 = vmul.f32 %v720, %v395
    %v737 = vmul.f32 %v721, %v395
    %v738 = vmul.f32 %v722, %v395
    %v739 = vmul.f32 %v723, %v395
    %v740 = vmul.f32 %v724, %v395
    %v741 = vmul.f32 %v725, %v395
    %v742 = vmul.f32 %v726, %v395
    %v743 = vmul.f32 %v727, %v395
    %v744 = vmul.f32 %v728, %v395
    %745 = vxpose.xlu0.c.b16.start [1/8] %v275, 128
    %746 = vxpose.xlu0.c.b16.cont [2/8] 0, 128
    %747 = vxpose.xlu0.c.b16.cont [3/8] 0, 128
    %748 = vxpose.xlu0.c.b16.cont [4/8] 0, 128
    %749 = vxpose.xlu0.c.b16.cont [5/8] 0, 128
    %750 = vxpose.xlu0.c.b16.cont [6/8] 0, 128
    %751 = vxpose.xlu0.c.b16.cont [7/8] 0, 128
    %752 = vxpose.xlu0.c.b16.end [8/8] 0, 128
    %v753 = vpop.trf.xlu0
    %v754 = vpop.trf.xlu0
    %v755 = vpop.trf.xlu0
    %v756 = vpop.trf.xlu0
    %v757 = vpop.trf.xlu0
    %v758 = vpop.trf.xlu0
    %v759 = vpop.trf.xlu0
    %v760 = vpop.trf.xlu0
    %v762 = vsel %vm428, %v753, 0
    %v765 = vsel %vm428, %v754, 0
    %v768 = vsel %vm428, %v755, 0
    %v771 = vsel %vm428, %v756, 0
    %v774 = vsel %vm428, %v757, 0
    %v777 = vsel %vm428, %v758, 0
    %v780 = vsel %vm428, %v759, 0
    %v783 = vsel %vm428, %v760, 0
    %v786 = vsel %vm453, %v181, 0
    %788 = vmatprep.subr.bf16.mxu0 0
    %789 = vmatpush1.bf16.msra.mxu0 %v786
    %790 = vmatprep.subr.bf16.mxu0 0
    %791 = vmatpush1.bf16.msra.mxu0 0
    %792 = vmatprep.subr.bf16.mxu0 0
    %793 = vmatpush1.bf16.msra.mxu0 0
    %794 = vmatprep.subr.bf16.mxu0 0
    %795 = vmatpush1.bf16.msra.mxu0 0
    %796 = vmatprep.subr.bf16.mxu0 0
    %797 = vmatpush1.bf16.msra.mxu0 0
    %798 = vmatprep.subr.bf16.mxu0 0
    %799 = vmatpush1.bf16.msra.mxu0 0
    %800 = vmatprep.subr.bf16.mxu0 0
    %801 = vmatpush1.bf16.msra.mxu0 0
    %802 = vmatprep.subr.bf16.mxu0 0
    %803 = vmatpush1.bf16.msra.mxu0 0
    %804 = vmatprep.subr.bf16.mxu0 0
    %805 = vmatpush1.bf16.msra.mxu0 0
    %806 = vmatprep.subr.bf16.mxu0 0
    %807 = vmatpush1.bf16.msra.mxu0 0
    %808 = vmatprep.subr.bf16.mxu0 0
    %809 = vmatpush1.bf16.msra.mxu0 0
    %810 = vmatprep.subr.bf16.mxu0 0
    %811 = vmatpush1.bf16.msra.mxu0 0
    %812 = vmatprep.subr.bf16.mxu0 0
    %813 = vmatpush1.bf16.msra.mxu0 0
    %814 = vmatprep.subr.bf16.mxu0 0
    %815 = vmatpush1.bf16.msra.mxu0 0
    %816 = vmatprep.subr.bf16.mxu0 0
    %817 = vmatpush1.bf16.msra.mxu0 0
    %818 = vmatprep.subr.bf16.mxu0 0
    %819 = vmatpush1.bf16.msra.mxu0 0
    %820 = vmatprep.mubr.bf16.mxu0 0
    %821 = vmatmul.mubr.bf16.gmra.mrb[0].mxu0 %v762
    %v822 = vpop.f32.mrb[0].mxu0
    %v823 = vadd.f32 %v729, %v822
    %v824 = vpop.f32.mrb[0].mxu0
    %v825 = vpop.f32.mrb[0].mxu0
    %v826 = vadd.f32 %v730, %v825
    %v827 = vpop.f32.mrb[0].mxu0
    %828 = vmatprep.mubr.bf16.mxu0 0
    %829 = vmatmul.mubr.bf16.gmra.mrb[0].mxu0 %v765
    %v830 = vpop.f32.mrb[0].mxu0
    %v831 = vadd.f32 %v731, %v830
    %v832 = vpop.f32.mrb[0].mxu0
    %v833 = vpop.f32.mrb[0].mxu0
    %v834 = vadd.f32 %v732, %v833
    %v835 = vpop.f32.mrb[0].mxu0
    %836 = vmatprep.mubr.bf16.mxu0 0
    %837 = vmatmul.mubr.bf16.gmra.mrb[0].mxu0 %v768
    %v838 = vpop.f32.mrb[0].mxu0
    %v839 = vadd.f32 %v733, %v838
    %v840 = vpop.f32.mrb[0].mxu0
    %v841 = vpop.f32.mrb[0].mxu0
    %v842 = vadd.f32 %v734, %v841
    %v843 = vpop.f32.mrb[0].mxu0
    %844 = vmatprep.mubr.bf16.mxu0 0
    %845 = vmatmul.mubr.bf16.gmra.mrb[0].mxu0 %v771
    %v846 = vpop.f32.mrb[0].mxu0
    %v847 = vadd.f32 %v735, %v846
    %v848 = vpop.f32.mrb[0].mxu0
    %v849 = vpop.f32.mrb[0].mxu0
    %v850 = vadd.f32 %v736, %v849
    %v851 = vpop.f32.mrb[0].mxu0
    %852 = vmatprep.mubr.bf16.mxu0 0
    %853 = vmatmul.mubr.bf16.gmra.mrb[0].mxu0 %v774
    %v854 = vpop.f32.mrb[0].mxu0
    %v855 = vadd.f32 %v737, %v854
    %v856 = vpop.f32.mrb[0].mxu0
    %v857 = vpop.f32.mrb[0].mxu0
    %v858 = vadd.f32 %v738, %v857
    %v859 = vpop.f32.mrb[0].mxu0
    %860 = vmatprep.mubr.bf16.mxu0 0
    %861 = vmatmul.mubr.bf16.gmra.mrb[0].mxu0 %v777
    %v862 = vpop.f32.mrb[0].mxu0
    %v863 = vadd.f32 %v739, %v862
    %v864 = vpop.f32.mrb[0].mxu0
    %v865 = vpop.f32.mrb[0].mxu0
    %v866 = vadd.f32 %v740, %v865
    %v867 = vpop.f32.mrb[0].mxu0
    %868 = vmatprep.mubr.bf16.mxu0 0
    %869 = vmatmul.mubr.bf16.gmra.mrb[0].mxu0 %v780
    %v870 = vpop.f32.mrb[0].mxu0
    %v871 = vadd.f32 %v741, %v870
    %v872 = vpop.f32.mrb[0].mxu0
    %v873 = vpop.f32.mrb[0].mxu0
    %v874 = vadd.f32 %v742, %v873
    %v875 = vpop.f32.mrb[0].mxu0
    %876 = vmatprep.mubr.bf16.mxu0 0
    %877 = vmatmul.mubr.bf16.gmra.mrb[0].mxu0 %v783
    %v878 = vpop.f32.mrb[0].mxu0
    %v879 = vadd.f32 %v743, %v878
    %v880 = vpop.f32.mrb[0].mxu0
    %v881 = vpop.f32.mrb[0].mxu0
    %v882 = vadd.f32 %v744, %v881
    %v883 = vpop.f32.mrb[0].mxu0
    %884 = vdwg.mxu0
    %v885 = vstv %s85
    %v886 = vmul.f32 %v885, %v823
    %v887 = vmul.f32 %v885, %v826
    %v888 = vmul.f32 %v885, %v831
    %v889 = vmul.f32 %v885, %v834
    %v890 = vmul.f32 %v885, %v839
    %v891 = vmul.f32 %v885, %v842
    %v892 = vmul.f32 %v885, %v847
    %v893 = vmul.f32 %v885, %v850
    %v894 = vmul.f32 %v885, %v855
    %v895 = vmul.f32 %v885, %v858
    %v896 = vmul.f32 %v885, %v863
    %v897 = vmul.f32 %v885, %v866
    %v898 = vmul.f32 %v885, %v871
    %v899 = vmul.f32 %v885, %v874
    %v900 = vmul.f32 %v885, %v879
    %v901 = vmul.f32 %v885, %v882
    %v902 = vadd.f32 %v681, %v886
    %v903 = vadd.f32 %v682, %v887
    %v904 = vadd.f32 %v683, %v888
    %v905 = vadd.f32 %v684, %v889
    %v906 = vadd.f32 %v685, %v890
    %v907 = vadd.f32 %v686, %v891
    %v908 = vadd.f32 %v687, %v892
    %v909 = vadd.f32 %v688, %v893
    %v910 = vadd.f32 %v689, %v894
    %v911 = vadd.f32 %v690, %v895
    %v912 = vadd.f32 %v691, %v896
    %v913 = vadd.f32 %v692, %v897
    %v914 = vadd.f32 %v693, %v898
    %v915 = vadd.f32 %v694, %v899
    %v916 = vadd.f32 %v695, %v900
    %v917 = vadd.f32 %v696, %v901
    %v918 = vld [vmem:[%s17] sm:$0xff]
    %v919 = vld [vmem:[%s17 + $0x8] sm:$0xff]
    %v920 = vld [vmem:[%s17 + $0x10] sm:$0xff]
    %v921 = vld [vmem:[%s17 + $0x18] sm:$0xff]
    %v922 = vld [vmem:[%s17 + $0x20] sm:$0xff]
    %v923 = vld [vmem:[%s17 + $0x28] sm:$0xff]
    %v924 = vld [vmem:[%s17 + $0x30] sm:$0xff]
    %v925 = vld [vmem:[%s17 + $0x38] sm:$0xff]
    %v926 = vld [vmem:[%s17 + $0x40] sm:$0xff]
    %v927 = vld [vmem:[%s17 + $0x48] sm:$0xff]
    %v928 = vld [vmem:[%s17 + $0x50] sm:$0xff]
    %v929 = vld [vmem:[%s17 + $0x58] sm:$0xff]
    %v930 = vld [vmem:[%s17 + $0x60] sm:$0xff]
    %v931 = vld [vmem:[%s17 + $0x68] sm:$0xff]
    %v932 = vld [vmem:[%s17 + $0x70] sm:$0xff]
    %v933 = vld [vmem:[%s17 + $0x78] sm:$0xff]
    %v934 = vstv %s89
    %v935 = vmul.f32 %v934, %v918
    %v936 = vmul.f32 %v934, %v919
    %v937 = vmul.f32 %v934, %v920
    %v938 = vmul.f32 %v934, %v921
    %v939 = vmul.f32 %v934, %v922
    %v940 = vmul.f32 %v934, %v923
    %v941 = vmul.f32 %v934, %v924
    %v942 = vmul.f32 %v934, %v925
    %v943 = vmul.f32 %v934, %v926
    %v944 = vmul.f32 %v934, %v927
    %v945 = vmul.f32 %v934, %v928
    %v946 = vmul.f32 %v934, %v929
    %v947 = vmul.f32 %v934, %v930
    %v948 = vmul.f32 %v934, %v931
    %v949 = vmul.f32 %v934, %v932
    %v950 = vmul.f32 %v934, %v933
    %v951 = vadd.f32 %v902, %v935
    %v952 = vadd.f32 %v903, %v936
    %v953 = vadd.f32 %v904, %v937
    %v954 = vadd.f32 %v905, %v938
    %v955 = vadd.f32 %v906, %v939
    %v956 = vadd.f32 %v907, %v940
    %v957 = vadd.f32 %v908, %v941
    %v958 = vadd.f32 %v909, %v942
    %v959 = vadd.f32 %v910, %v943
    %v960 = vadd.f32 %v911, %v944
    %v961 = vadd.f32 %v912, %v945
    %v962 = vadd.f32 %v913, %v946
    %v963 = vadd.f32 %v914, %v947
    %v964 = vadd.f32 %v915, %v948
    %v965 = vadd.f32 %v916, %v949
    %v966 = vadd.f32 %v917, %v950
    %967 = vst [vmem:[%s23] sm:$0xff] %v951
    %968 = vst [vmem:[%s23 + $0x8] sm:$0xff] %v952
    %969 = vst [vmem:[%s23 + $0x10] sm:$0xff] %v953
    %970 = vst [vmem:[%s23 + $0x18] sm:$0xff] %v954
    %971 = vst [vmem:[%s23 + $0x20] sm:$0xff] %v955
    %972 = vst [vmem:[%s23 + $0x28] sm:$0xff] %v956
    %973 = vst [vmem:[%s23 + $0x30] sm:$0xff] %v957
    %974 = vst [vmem:[%s23 + $0x38] sm:$0xff] %v958
    %975 = vst [vmem:[%s23 + $0x40] sm:$0xff] %v959
    %976 = vst [vmem:[%s23 + $0x48] sm:$0xff] %v960
    %977 = vst [vmem:[%s23 + $0x50] sm:$0xff] %v961
    %978 = vst [vmem:[%s23 + $0x58] sm:$0xff] %v962
    %979 = vst [vmem:[%s23 + $0x60] sm:$0xff] %v963
    %980 = vst [vmem:[%s23 + $0x68] sm:$0xff] %v964
    %981 = vst [vmem:[%s23 + $0x70] sm:$0xff] %v965
    %982 = vst [vmem:[%s23 + $0x78] sm:$0xff] %v966
    %v983 = vld [vmem:[%s14] sm:$0x1]
    %v984 = vmul.f32 %v983, 0.95
    %v985 = vld [vmem:[%s10] sm:$0x1]
    %v986 = vsub.f32 %v124, %v985
    %v987 = vmul.f32 %v986, %v656
    %v988 = vadd.f32 %v281, %v987
    %v989 = vmul.f32 %v885, %v988
    %v990 = vadd.f32 %v984, %v989
    %v991 = vld [vmem:[%s18] sm:$0x1]
    %v992 = vmul.f32 %v934, %v991
    %v993 = vadd.f32 %v990, %v992
    %994 = vst [vmem:[%s24] sm:$0x1] %v993
    // Predicated region
    $region82: #{step.1} parent=1 // pred_check
      _
    $region83: #{step.1} parent=1 // pred_check_branch
      %996 = sbr.rel (0) target = $region85
    $region84: #{step.1} parent=1 // pred_region
      %s998 = ssub.s32 128, 128
      %999 = vsyncadd [#allocation3], %s998
      %s1001 = sshll.u32 [#allocation5], 4
      %s1002 = int_to_ptr.vmem [resolvable:$true] %s1001
      %1004 = dma.vmem_to_hbm [thread:$0]  %s1002, 128, %s19, [#allocation3]
    $region85: #{step.1} parent=1 // pred_fallthru
      _
    // Predicated region
    $region86: #{step.1} parent=1 // pred_check
      _
    $region87: #{step.1} parent=1 // pred_check_branch
      %1006 = sbr.rel (0) target = $region89
    $region88: #{step.1} parent=1 // pred_region
      %s1008 = ssub.s32 16, 16
      %1009 = vsyncadd [#allocation7], %s1008
      %s1011 = sshll.u32 [#allocation6], 4
      %s1012 = int_to_ptr.vmem [resolvable:$true] %s1011
      %1014 = dma.vmem_to_hbm [thread:$0]  %s1012, 16, %s20, [#allocation7]
    $region89: #{step.1} parent=1 // pred_fallthru
      _
    // Predicated region
    $region90: #{step.1} parent=1 // pred_check
      _
    $region91: #{step.1} parent=1 // pred_check_branch
      %1016 = sbr.rel (0) target = $region93
    $region92: #{step.1} parent=1 // pred_region
      _
    $region93: #{step.1} parent=1 // pred_fallthru
      _
    // Predicated region
    $region94: #{step.1} parent=1 // pred_check
      _
    $region95: #{step.1} parent=1 // pred_check_branch
      %1018 = sbr.rel (0) target = $region97
    $region96: #{step.1} parent=1 // pred_region
      _
    $region97: #{step.1} parent=1 // pred_fallthru
      _
    // Predicated region
    $region98: #{step.1} parent=1 // pred_check
      _
    $region99: #{step.1} parent=1 // pred_check_branch
      %1020 = sbr.rel (0) target = $region101
    $region100: #{step.1} parent=1 // pred_region
      _
    $region101: #{step.1} parent=1 // pred_fallthru
      _
    // Predicated region
    $region102: #{step.1} parent=1 // pred_check
      _
    $region103: #{step.1} parent=1 // pred_check_branch
      %1022 = sbr.rel (0) target = $region105
    $region104: #{step.1} parent=1 // pred_region
      _
    $region105: #{step.1} parent=1 // pred_fallthru
      _
    // Predicated region
    $region106: #{step.1} parent=1 // pred_check
      _
    $region107: #{step.1} parent=1 // pred_check_branch
      %1024 = sbr.rel (0) target = $region109
    $region108: #{step.1} parent=1 // pred_region
      %1025 = dma.done [#allocation3], 128
    $region109: #{step.1} parent=1 // pred_fallthru
      _
    // Predicated region
    $region110: #{step.1} parent=1 // pred_check
      _
    $region111: #{step.1} parent=1 // pred_check_branch
      %1027 = sbr.rel (0) target = $region113
    $region112: #{step.1} parent=1 // pred_region
      %1028 = dma.done [#allocation7], 16
    $region113: #{step.1} parent=1 // pred_fallthru
      _
    // Predicated region
    $region114: #{step.1} parent=1 // pred_check
      _
    $region115: #{step.1} parent=1 // pred_check_branch
      %1030 = sbr.rel (0) target = $region117
    $region116: #{step.1} parent=1 // pred_region
      _
    $region117: #{step.1} parent=1 // pred_fallthru
      _
    // Predicated region
    $region118: #{step.1} parent=1 // pred_check
      _
    $region119: #{step.1} parent=1 // pred_check_branch
      %1032 = sbr.rel (0) target = $region121
    $region120: #{step.1} parent=1 // pred_region
      _
    $region121: #{step.1} parent=1 // pred_fallthru
      _
    // Predicated region
    $region122: #{step.1} parent=1 // pred_check
      _
    $region123: #{step.1} parent=1 // pred_check_branch
      %1034 = sbr.rel (0) target = $region125
    $region124: #{step.1} parent=1 // pred_region
      _
    $region125: #{step.1} parent=1 // pred_fallthru
      _
    // Predicated region
    $region126: #{step.1} parent=1 // pred_check
      _
    $region127: #{step.1} parent=1 // pred_check_branch
      %1036 = sbr.rel (0) target = $region129
    $region128: #{step.1} parent=1 // pred_region
      _
    $region129: #{step.1} parent=1 // pred_fallthru
      _
    %1037 = vsyncpa [#allocation3], 1
    %1038 = vsyncpa [#allocation7], 1
    %1039 = vsyncpa [#allocation4], 1

</llo_original>
